<compile_context>
chip_gen: v5e
topology: v5e:2x2
jax: 0.10.0
libtpu: 0.0.40
codegen_flags: <defaults>
</compile_context>

<pallas_src>
import jax
import jax.numpy as jnp
from jax.experimental import pallas as pl
from jax.experimental.pallas import tpu as pltpu


def _sha_kernel(x_ref, pool_hv_ref, sel_h2_ref, sel_v_ref, exp_h_ref, exp_v_ref,
                ids_ref, shm_ref, bdw1_ref, b1_ref, bdw5_ref, b3_ref, o_ref):
    S, hw = x_ref.shape                      # S = bt * c
    h = exp_h_ref.shape[0]
    w = exp_v_ref.shape[0]
    f32 = jnp.float32
    dotf = lambda a, b: jnp.dot(a, b, preferred_element_type=f32)

    x = x_ref[...].astype(f32)                               # (S, hw) lane-dense slab
    ids_small = ids_ref[...]                                  # (8, hw) f32 row ids
    ids = jnp.broadcast_to(ids_small[0:1, :], (S, hw))        # hoisted once

    # --- per-row (over w) masked max scan, single direction.  The row-id map is
    # rolled with the same primitive as the data => gating is correct whatever
    # the hw roll convention; afterwards the FIRST or LAST lane of each row
    # holds the full row max and every lane holds a within-row partial max.
    ymax = x
    s = 1
    while s < w:
        rids = jnp.broadcast_to(pltpu.roll(ids_small, s, axis=1)[0:1, :], (S, hw))
        ymax = jnp.where(rids == ids,
                         jnp.maximum(ymax, pltpu.roll(ymax, s, axis=1)),
                         ymax)
        s *= 2

    # --- per-column (over h) cyclic max scan: circular shifts by multiples of w
    # stay inside the column class, so EVERY lane ends with the column max.
    zmax = x
    s = w
    while s < hw:
        zmax = jnp.maximum(zmax, pltpu.roll(zmax, s, axis=1))
        s *= 2

    # --- mean + max pooling as three MXU contractions over K = hw.
    mean_hv = dotf(x, pool_hv_ref[...])                       # (S, h + w)
    mh2 = dotf(ymax, sel_h2_ref[...])                         # (S, 2h): [first | last] lane
    maxh = jnp.maximum(mh2[:, :h], mh2[:, h:])                # row max either convention
    maxv = dotf(zmax, sel_v_ref[...])                         # (S, w)
    enc = mean_hv + jnp.concatenate([maxh, maxv], axis=1)     # (S, h + w)

    # --- 1x1 conv (block-diagonal over the batch tile) + ReLU6: one matmul.
    r = jnp.clip(dotf(bdw1_ref[...], enc) + b1_ref[...], 0.0, 6.0)   # (bt*c_r, h+w)

    # --- 3x3 conv on width-1 / height-1 encodings: 5 distinct taps stacked into
    # one block-diagonal matmul, then +/-1 lane shifts via tiny region-restricted
    # shift matrices (MXU, direction-independent).
    u = dotf(bdw5_ref[...], r)                                # (5*S, h+w), tap-major rows
    u_h0 = u[0 * S:1 * S]        # w3[:, :, 0, 1]  (needs source y-1)
    u_c = u[1 * S:2 * S]         # w3[:, :, 1, 1]  (centre tap, both branches)
    u_h2 = u[2 * S:3 * S]        # w3[:, :, 2, 1]  (needs source y+1)
    u_v0 = u[3 * S:4 * S]        # w3[:, :, 1, 0]  (needs source x-1)
    u_v2 = u[4 * S:5 * S]        # w3[:, :, 1, 2]  (needs source x+1)
    hv = (u_c
          + dotf(u_h0, shm_ref[0]) + dotf(u_h2, shm_ref[1])
          + dotf(u_v0, shm_ref[2]) + dotf(u_v2, shm_ref[3])
          + b3_ref[...])                                      # (S, h+w) = [hcv | vcv]

    # --- outer-product gate expanded lane-dense (two 0/1 matmuls) + residual.
    attn = jax.nn.sigmoid(dotf(hv[:, :h], exp_h_ref[...]) *
                          dotf(hv[:, h:], exp_v_ref[...]))    # (S, hw)
    o_ref[...] = (x * (attn + 1.0)).astype(o_ref.dtype)


def _vmem_capacity_bytes():
    try:
        info = pltpu.get_tpu_info()
        for name in ("vmem_capacity_bytes", "vmem_bytes", "vmem_size_bytes"):
            v = getattr(info, name, None)
            if v:
                return int(v)
    except Exception:
        pass
    return 64 * 1024 * 1024          # conservative default (v7x per-TensorCore)


def _pick_batch_tile(b, c, c_r, hw, in_item, out_item, const_bytes, vmem_cap):
    # Per-image VMEM that scales with the tile: double-buffered input & output
    # blocks plus ~6 live f32 slabs (x / ymax / zmax / two expansions / gate).
    per_img = c * hw * (2 * in_item + 2 * out_item + 6 * 4)
    budget = int(0.5 * vmem_cap) - 2 * const_bytes
    bt_mem = max(1, budget // per_img) if budget > 0 else 1
    # keep the block-diagonal weight constants (~24*bt^2*c*c_r bytes) small
    bt_bd = max(1, int((4.0 * 2**20 / (24.0 * c * c_r)) ** 0.5))
    bt_cap = int(max(1, min(b, 64, bt_mem, bt_bd)))

    def shape_ok(bt):
        return (bt * c) % 8 == 0 or bt == b          # (8, 128) block rule

    best = None
    for bt in range(bt_cap, 0, -1):
        if b % bt:
            continue
        if not shape_ok(bt):
            continue
        if best is None:
            best = bt
        if (b // bt) % 2 == 0:       # even grid-step count keeps both v7x cores busy
            return bt
    return best if best is not None else b


def sha_layer_v2(fea, w1, b1, w3, b3, *, block_batch=None):
    """fea: (b, c, h, w) NCHW.  w1: (c_r, c) 1x1 conv.  w3: (c, c_r, 3, 3)."""
    b, c, h, w = fea.shape
    c_r = w1.shape[0]
    hw = h * w
    p = h + w
    f32 = jnp.float32
    # TODO(synk): if h*w is not a multiple of 128, pad the lane dimension (and the
    # pooling/selector/expansion matrices) host-side to keep stores lane-dense.

    # ---- batch-tile independent constants -----------------------------------
    q = jnp.arange(hw)
    hid = q // w
    wid = q % w
    pool_hv = jnp.concatenate(
        [(hid[:, None] == jnp.arange(h)[None, :]).astype(f32) / w,
         (wid[:, None] == jnp.arange(w)[None, :]).astype(f32) / h], axis=1)    # (hw, h+w)
    row_start = jnp.arange(h) * w
    sel_h2 = jnp.concatenate(
        [(q[:, None] == row_start[None, :]).astype(f32),
         (q[:, None] == (row_start + w - 1)[None, :]).astype(f32)], axis=1)    # (hw, 2h)
    sel_v = (q[:, None] == jnp.arange(w)[None, :]).astype(f32)                 # (hw, w)
    exp_h = (jnp.arange(h)[:, None] == hid[None, :]).astype(f32)               # (h, hw)
    exp_v = (jnp.arange(w)[:, None] == wid[None, :]).astype(f32)               # (w, hw)
    ids8 = jnp.broadcast_to(hid.astype(f32)[None, :], (8, hw))                 # (8, hw)
    rows = jnp.arange(p)[:, None]
    eye_p = jnp.eye(p, k=1, dtype=f32)
    eye_m = jnp.eye(p, k=-1, dtype=f32)
    shmats = jnp.stack([eye_p * (rows <= h - 2),     # H branch: source y-1 -> lane y
                        eye_m * (rows <= h - 1),     # H branch: source y+1 -> lane y
                        eye_p * (rows >= h),         # V branch: source x-1 -> lane x
                        eye_m * (rows >= h + 1)])    # V branch: source x+1 -> lane x
    const_fixed = (pool_hv, sel_h2, sel_v, exp_h, exp_v, ids8, shmats)
    const_bytes = sum(int(a.size) * 4 for a in const_fixed)

    # ---- batch tile & VMEM limit, derived per generation ---------------------
    vmem_cap = _vmem_capacity_bytes()
    itemsize = fea.dtype.itemsize
    if block_batch is None:
        bt = _pick_batch_tile(b, c, c_r, hw, itemsize, itemsize, const_bytes, vmem_cap)
    else:
        bt = max(1, min(int(block_batch), b))
        while b % bt:
            bt -= 1
    vmem_limit = int(max(32 * 2**20, min(0.8 * vmem_cap, 100 * 2**20)))

    # ---- batch-tile dependent (block-diagonal) weight constants --------------
    eye_bt = jnp.eye(bt, dtype=f32)
    bdw1 = jnp.kron(eye_bt, w1.astype(f32))                                    # (bt*c_r, bt*c)
    b1c = jnp.tile(b1.astype(f32).reshape(c_r, 1), (bt, 1))                    # (bt*c_r, 1)
    taps = jnp.stack([w3[:, :, 0, 1], w3[:, :, 1, 1], w3[:, :, 2, 1],
                      w3[:, :, 1, 0], w3[:, :, 1, 2]], axis=0).astype(f32)     # (5, c, c_r)
    bdw5 = jnp.einsum('tcr,ij->ticjr', taps, eye_bt).reshape(5 * bt * c, bt * c_r)
    b3c = jnp.tile(b3.astype(f32).reshape(c, 1), (bt, 1))                      # (bt*c, 1)
    consts = const_fixed + (bdw1, b1c, bdw5, b3c)

    def const_spec(a):
        nd = a.ndim
        return pl.BlockSpec(a.shape, lambda i, nd=nd: (0,) * nd)

    x2d = fea.reshape(b * c, hw)       # free, contiguity-preserving, lane-dense
    out2d = pl.pallas_call(
        _sha_kernel,
        out_shape=jax.ShapeDtypeStruct((b * c, hw), fea.dtype),
        grid_spec=pltpu.PrefetchScalarGridSpec(
            num_scalar_prefetch=0,
            grid=(b // bt,),
            in_specs=[pl.BlockSpec((bt * c, hw), lambda i: (i, 0))]
                     + [const_spec(a) for a in consts],
            out_specs=pl.BlockSpec((bt * c, hw), lambda i: (i, 0))),
        compiler_params=pltpu.CompilerParams(
            dimension_semantics=("parallel",),
            vmem_limit_bytes=vmem_limit),
    )(x2d, *consts)
    return out2d.reshape(b, c, h, w)


def sha_layer_v2_ref(fea, w1, b1, w3, b3):
    """Pure-JAX reference matching the PyTorch module exactly."""
    b, c, h, w = fea.shape
    c_r = w1.shape[0]
    H_enc = jnp.mean(fea, axis=3, keepdims=True) + jnp.max(fea, axis=3, keepdims=True)
    V_enc = jnp.mean(fea, axis=2, keepdims=True) + jnp.max(fea, axis=2, keepdims=True)
    V_enc = V_enc.reshape(b, c, w, 1)
    enc = jnp.concatenate([H_enc, V_enc], axis=2)                    # (b, c, h+w, 1)
    enc = jax.lax.conv_general_dilated(
        enc, w1.reshape(c_r, c, 1, 1), (1, 1), "VALID",
        dimension_numbers=("NCHW", "OIHW", "NCHW")) + b1.reshape(1, c_r, 1, 1)
    enc = jnp.clip(enc, 0.0, 6.0)
    H = enc[:, :, :h, :]                                             # (b, c_r, h, 1)
    V = enc[:, :, h:, :].reshape(b, c_r, 1, w)                       # (b, c_r, 1, w)
    conv3 = lambda x: jax.lax.conv_general_dilated(
        x, w3, (1, 1), ((1, 1), (1, 1)),
        dimension_numbers=("NCHW", "OIHW", "NCHW")) + b3.reshape(1, c, 1, 1)
    attn = jax.nn.sigmoid(conv3(H) * conv3(V))
    return attn * fea + fea


if __name__ == "__main__":
    B, C, Hs, Ws = 2, 16, 16, 16
    reduction = 4
    C_R = C // reduction

    key = jax.random.PRNGKey(0)
    k_fea, k_w1, k_b1, k_w3, k_b3 = jax.random.split(key, 5)

    fea = jax.random.normal(k_fea, (B, C, Hs, Ws), dtype=jnp.float32)
    w1 = jax.random.normal(k_w1, (C_R, C), dtype=jnp.float32) * 0.2
    b1 = jax.random.normal(k_b1, (C_R,), dtype=jnp.float32) * 0.1
    w3 = jax.random.normal(k_w3, (C, C_R, 3, 3), dtype=jnp.float32) * 0.2
    b3 = jax.random.normal(k_b3, (C,), dtype=jnp.float32) * 0.1

    out = sha_layer_v2(fea, w1, b1, w3, b3)
    out = jax.block_until_ready(out)

    ref = sha_layer_v2_ref(fea, w1, b1, w3, b3)
    err = float(jnp.max(jnp.abs(out - ref)))
    assert out.shape == (B, C, Hs, Ws)
    assert jnp.allclose(out, ref, atol=5e-4, rtol=5e-4), f"max abs err {err}"

    print("KERNEL_OK")
</pallas_src>

<mosaic_0001>
module attributes {stable_mosaic.version = 11 : i64} {
  func.func @_sha_kernel(%arg0: i32, %arg1: memref<16x256xf32, #tpu.memory_space<vmem>>, %arg2: memref<256x32xf32, #tpu.memory_space<vmem>>, %arg3: memref<256x32xf32, #tpu.memory_space<vmem>>, %arg4: memref<256x16xf32, #tpu.memory_space<vmem>>, %arg5: memref<16x256xf32, #tpu.memory_space<vmem>>, %arg6: memref<16x256xf32, #tpu.memory_space<vmem>>, %arg7: memref<8x256xf32, #tpu.memory_space<vmem>>, %arg8: memref<4x32x32xf32, #tpu.memory_space<vmem>>, %arg9: memref<4x16xf32, #tpu.memory_space<vmem>>, %arg10: memref<4x1xf32, #tpu.memory_space<vmem>>, %arg11: memref<80x4xf32, #tpu.memory_space<vmem>>, %arg12: memref<16x1xf32, #tpu.memory_space<vmem>>, %arg13: memref<16x256xf32, #tpu.memory_space<vmem>>) attributes {dimension_semantics = [#tpu.dimension_semantics<parallel>], iteration_bounds = array<i64: 2>, scalar_prefetch = 0 : i64, scratch_operands = 0 : i64, tpu.core_type = #tpu.core_type<tc>, window_params = [{transform_indices = @transform_0, window_bounds = array<i64: 16, 256>}, {pipeline_mode = #tpu.pipeline_mode<synchronous>, transform_indices = @transform_1, window_bounds = array<i64: 256, 32>}, {pipeline_mode = #tpu.pipeline_mode<synchronous>, transform_indices = @transform_2, window_bounds = array<i64: 256, 32>}, {pipeline_mode = #tpu.pipeline_mode<synchronous>, transform_indices = @transform_3, window_bounds = array<i64: 256, 16>}, {pipeline_mode = #tpu.pipeline_mode<synchronous>, transform_indices = @transform_4, window_bounds = array<i64: 16, 256>}, {pipeline_mode = #tpu.pipeline_mode<synchronous>, transform_indices = @transform_5, window_bounds = array<i64: 16, 256>}, {pipeline_mode = #tpu.pipeline_mode<synchronous>, transform_indices = @transform_6, window_bounds = array<i64: 8, 256>}, {pipeline_mode = #tpu.pipeline_mode<synchronous>, transform_indices = @transform_7, window_bounds = array<i64: 4, 32, 32>}, {pipeline_mode = #tpu.pipeline_mode<synchronous>, transform_indices = @transform_8, window_bounds = array<i64: 4, 16>}, {pipeline_mode = #tpu.pipeline_mode<synchronous>, transform_indices = @transform_9, window_bounds = array<i64: 4, 1>}, {pipeline_mode = #tpu.pipeline_mode<synchronous>, transform_indices = @transform_10, window_bounds = array<i64: 80, 4>}, {pipeline_mode = #tpu.pipeline_mode<synchronous>, transform_indices = @transform_11, window_bounds = array<i64: 16, 1>}, {transform_indices = @transform_12, window_bounds = array<i64: 16, 256>}]} {
    %c0 = arith.constant 0 : index
    %c0_0 = arith.constant 0 : index
    %0 = vector.load %arg1[%c0, %c0_0] : memref<16x256xf32, #tpu.memory_space<vmem>>, vector<16x256xf32>
    %c0_1 = arith.constant 0 : index
    %c0_2 = arith.constant 0 : index
    %1 = vector.load %arg7[%c0_1, %c0_2] : memref<8x256xf32, #tpu.memory_space<vmem>>, vector<8x256xf32>
    %2 = vector.extract_strided_slice %1 {offsets = [0, 0], sizes = [1, 256], strides = [1, 1]} : vector<8x256xf32> to vector<1x256xf32>
    %3 = vector.shape_cast %2 : vector<1x256xf32> to vector<1x256xf32>
    %4 = vector.broadcast %3 : vector<1x256xf32> to vector<16x256xf32>
    %c1_i32 = arith.constant 1 : i32
    %5 = tpu.dynamic_rotate %1 by %c1_i32 dim 1 : vector<8x256xf32>, i32 -> vector<8x256xf32>
    %6 = vector.extract_strided_slice %5 {offsets = [0, 0], sizes = [1, 256], strides = [1, 1]} : vector<8x256xf32> to vector<1x256xf32>
    %7 = vector.shape_cast %6 : vector<1x256xf32> to vector<1x256xf32>
    %8 = vector.broadcast %7 : vector<1x256xf32> to vector<16x256xf32>
    %9 = arith.cmpf oeq, %8, %4 : vector<16x256xf32>
    %c1_i32_3 = arith.constant 1 : i32
    %10 = tpu.dynamic_rotate %0 by %c1_i32_3 dim 1 : vector<16x256xf32>, i32 -> vector<16x256xf32>
    %11 = arith.maximumf %0, %10 : vector<16x256xf32>
    %12 = arith.select %9, %11, %0 : vector<16x256xi1>, vector<16x256xf32>
    %c2_i32 = arith.constant 2 : i32
    %13 = tpu.dynamic_rotate %1 by %c2_i32 dim 1 : vector<8x256xf32>, i32 -> vector<8x256xf32>
    %14 = vector.extract_strided_slice %13 {offsets = [0, 0], sizes = [1, 256], strides = [1, 1]} : vector<8x256xf32> to vector<1x256xf32>
    %15 = vector.shape_cast %14 : vector<1x256xf32> to vector<1x256xf32>
    %16 = vector.broadcast %15 : vector<1x256xf32> to vector<16x256xf32>
    %17 = arith.cmpf oeq, %16, %4 : vector<16x256xf32>
    %c2_i32_4 = arith.constant 2 : i32
    %18 = tpu.dynamic_rotate %12 by %c2_i32_4 dim 1 : vector<16x256xf32>, i32 -> vector<16x256xf32>
    %19 = arith.maximumf %12, %18 : vector<16x256xf32>
    %20 = arith.select %17, %19, %12 : vector<16x256xi1>, vector<16x256xf32>
    %c4_i32 = arith.constant 4 : i32
    %21 = tpu.dynamic_rotate %1 by %c4_i32 dim 1 : vector<8x256xf32>, i32 -> vector<8x256xf32>
    %22 = vector.extract_strided_slice %21 {offsets = [0, 0], sizes = [1, 256], strides = [1, 1]} : vector<8x256xf32> to vector<1x256xf32>
    %23 = vector.shape_cast %22 : vector<1x256xf32> to vector<1x256xf32>
    %24 = vector.broadcast %23 : vector<1x256xf32> to vector<16x256xf32>
    %25 = arith.cmpf oeq, %24, %4 : vector<16x256xf32>
    %c4_i32_5 = arith.constant 4 : i32
    %26 = tpu.dynamic_rotate %20 by %c4_i32_5 dim 1 : vector<16x256xf32>, i32 -> vector<16x256xf32>
    %27 = arith.maximumf %20, %26 : vector<16x256xf32>
    %28 = arith.select %25, %27, %20 : vector<16x256xi1>, vector<16x256xf32>
    %c8_i32 = arith.constant 8 : i32
    %29 = tpu.dynamic_rotate %1 by %c8_i32 dim 1 : vector<8x256xf32>, i32 -> vector<8x256xf32>
    %30 = vector.extract_strided_slice %29 {offsets = [0, 0], sizes = [1, 256], strides = [1, 1]} : vector<8x256xf32> to vector<1x256xf32>
    %31 = vector.shape_cast %30 : vector<1x256xf32> to vector<1x256xf32>
    %32 = vector.broadcast %31 : vector<1x256xf32> to vector<16x256xf32>
    %33 = arith.cmpf oeq, %32, %4 : vector<16x256xf32>
    %c8_i32_6 = arith.constant 8 : i32
    %34 = tpu.dynamic_rotate %28 by %c8_i32_6 dim 1 : vector<16x256xf32>, i32 -> vector<16x256xf32>
    %35 = arith.maximumf %28, %34 : vector<16x256xf32>
    %36 = arith.select %33, %35, %28 : vector<16x256xi1>, vector<16x256xf32>
    %c16_i32 = arith.constant 16 : i32
    %37 = tpu.dynamic_rotate %0 by %c16_i32 dim 1 : vector<16x256xf32>, i32 -> vector<16x256xf32>
    %38 = arith.maximumf %0, %37 : vector<16x256xf32>
    %c32_i32 = arith.constant 32 : i32
    %39 = tpu.dynamic_rotate %38 by %c32_i32 dim 1 : vector<16x256xf32>, i32 -> vector<16x256xf32>
    %40 = arith.maximumf %38, %39 : vector<16x256xf32>
    %c64_i32 = arith.constant 64 : i32
    %41 = tpu.dynamic_rotate %40 by %c64_i32 dim 1 : vector<16x256xf32>, i32 -> vector<16x256xf32>
    %42 = arith.maximumf %40, %41 : vector<16x256xf32>
    %c128_i32 = arith.constant 128 : i32
    %43 = tpu.dynamic_rotate %42 by %c128_i32 dim 1 : vector<16x256xf32>, i32 -> vector<16x256xf32>
    %44 = arith.maximumf %42, %43 : vector<16x256xf32>
    %c0_7 = arith.constant 0 : index
    %c0_8 = arith.constant 0 : index
    %45 = vector.load %arg2[%c0_7, %c0_8] : memref<256x32xf32, #tpu.memory_space<vmem>>, vector<256x32xf32>
    %cst = arith.constant dense<0.000000e+00> : vector<16x32xf32>
    %46 = tpu.matmul %0, %45, %cst {dimension_numbers = #tpu.dot_dimension_numbers<[1], [0], [0], [1], [0, 0, 1, 1], [], []>} : vector<16x256xf32>, vector<256x32xf32>, vector<16x32xf32> -> vector<16x32xf32>
    %c0_9 = arith.constant 0 : index
    %c0_10 = arith.constant 0 : index
    %47 = vector.load %arg3[%c0_9, %c0_10] : memref<256x32xf32, #tpu.memory_space<vmem>>, vector<256x32xf32>
    %cst_11 = arith.constant dense<0.000000e+00> : vector<16x32xf32>
    %48 = tpu.matmul %36, %47, %cst_11 {dimension_numbers = #tpu.dot_dimension_numbers<[1], [0], [0], [1], [0, 0, 1, 1], [], []>} : vector<16x256xf32>, vector<256x32xf32>, vector<16x32xf32> -> vector<16x32xf32>
    %49 = vector.extract_strided_slice %48 {offsets = [0, 0], sizes = [16, 16], strides = [1, 1]} : vector<16x32xf32> to vector<16x16xf32>
    %50 = vector.extract_strided_slice %48 {offsets = [0, 16], sizes = [16, 16], strides = [1, 1]} : vector<16x32xf32> to vector<16x16xf32>
    %51 = arith.maximumf %49, %50 : vector<16x16xf32>
    %c0_12 = arith.constant 0 : index
    %c0_13 = arith.constant 0 : index
    %52 = vector.load %arg4[%c0_12, %c0_13] : memref<256x16xf32, #tpu.memory_space<vmem>>, vector<256x16xf32>
    %cst_14 = arith.constant dense<0.000000e+00> : vector<16x16xf32>
    %53 = tpu.matmul %44, %52, %cst_14 {dimension_numbers = #tpu.dot_dimension_numbers<[1], [0], [0], [1], [0, 0, 1, 1], [], []>} : vector<16x256xf32>, vector<256x16xf32>, vector<16x16xf32> -> vector<16x16xf32>
    %54 = tpu.concatenate %51, %53 in 1 : vector<16x16xf32>, vector<16x16xf32> -> vector<16x32xf32>
    %55 = arith.addf %46, %54 : vector<16x32xf32>
    %c0_15 = arith.constant 0 : index
    %c0_16 = arith.constant 0 : index
    %56 = vector.load %arg9[%c0_15, %c0_16] : memref<4x16xf32, #tpu.memory_space<vmem>>, vector<4x16xf32>
    %cst_17 = arith.constant dense<0.000000e+00> : vector<4x32xf32>
    %57 = tpu.matmul %56, %55, %cst_17 {dimension_numbers = #tpu.dot_dimension_numbers<[1], [0], [0], [1], [0, 0, 1, 1], [], []>} : vector<4x16xf32>, vector<16x32xf32>, vector<4x32xf32> -> vector<4x32xf32>
    %c0_18 = arith.constant 0 : index
    %c0_19 = arith.constant 0 : index
    %58 = vector.load %arg10[%c0_18, %c0_19] : memref<4x1xf32, #tpu.memory_space<vmem>>, vector<4x1xf32>
    %59 = vector.broadcast %58 : vector<4x1xf32> to vector<4x32xf32>
    %60 = arith.addf %57, %59 : vector<4x32xf32>
    %cst_20 = arith.constant 0.000000e+00 : f32
    %cst_21 = arith.constant 6.000000e+00 : f32
    %61 = vector.broadcast %cst_20 : f32 to vector<4x32xf32>
    %62 = arith.maximumf %61, %60 : vector<4x32xf32>
    %63 = vector.broadcast %cst_21 : f32 to vector<4x32xf32>
    %64 = arith.minimumf %63, %62 : vector<4x32xf32>
    %c0_22 = arith.constant 0 : index
    %c0_23 = arith.constant 0 : index
    %65 = vector.load %arg11[%c0_22, %c0_23] : memref<80x4xf32, #tpu.memory_space<vmem>>, vector<80x4xf32>
    %cst_24 = arith.constant dense<0.000000e+00> : vector<80x32xf32>
    %66 = tpu.matmul %65, %64, %cst_24 {dimension_numbers = #tpu.dot_dimension_numbers<[1], [0], [0], [1], [0, 0, 1, 1], [], []>} : vector<80x4xf32>, vector<4x32xf32>, vector<80x32xf32> -> vector<80x32xf32>
    %67 = vector.extract_strided_slice %66 {offsets = [0, 0], sizes = [16, 32], strides = [1, 1]} : vector<80x32xf32> to vector<16x32xf32>
    %68 = vector.extract_strided_slice %66 {offsets = [16, 0], sizes = [16, 32], strides = [1, 1]} : vector<80x32xf32> to vector<16x32xf32>
    %69 = vector.extract_strided_slice %66 {offsets = [32, 0], sizes = [16, 32], strides = [1, 1]} : vector<80x32xf32> to vector<16x32xf32>
    %70 = vector.extract_strided_slice %66 {offsets = [48, 0], sizes = [16, 32], strides = [1, 1]} : vector<80x32xf32> to vector<16x32xf32>
    %71 = vector.extract_strided_slice %66 {offsets = [64, 0], sizes = [16, 32], strides = [1, 1]} : vector<80x32xf32> to vector<16x32xf32>
    %c0_25 = arith.constant 0 : index
    %c0_26 = arith.constant 0 : index
    %c0_27 = arith.constant 0 : index
    %72 = vector.load %arg8[%c0_25, %c0_26, %c0_27] : memref<4x32x32xf32, #tpu.memory_space<vmem>>, vector<1x32x32xf32>
    %73 = vector.shape_cast %72 : vector<1x32x32xf32> to vector<32x32xf32>
    %cst_28 = arith.constant dense<0.000000e+00> : vector<16x32xf32>
    %74 = tpu.matmul %67, %73, %cst_28 {dimension_numbers = #tpu.dot_dimension_numbers<[1], [0], [0], [1], [0, 0, 1, 1], [], []>} : vector<16x32xf32>, vector<32x32xf32>, vector<16x32xf32> -> vector<16x32xf32>
    %75 = arith.addf %68, %74 : vector<16x32xf32>
    %c1 = arith.constant 1 : index
    %c0_29 = arith.constant 0 : index
    %c0_30 = arith.constant 0 : index
    %76 = vector.load %arg8[%c1, %c0_29, %c0_30] : memref<4x32x32xf32, #tpu.memory_space<vmem>>, vector<1x32x32xf32>
    %77 = vector.shape_cast %76 : vector<1x32x32xf32> to vector<32x32xf32>
    %cst_31 = arith.constant dense<0.000000e+00> : vector<16x32xf32>
    %78 = tpu.matmul %69, %77, %cst_31 {dimension_numbers = #tpu.dot_dimension_numbers<[1], [0], [0], [1], [0, 0, 1, 1], [], []>} : vector<16x32xf32>, vector<32x32xf32>, vector<16x32xf32> -> vector<16x32xf32>
    %79 = arith.addf %75, %78 : vector<16x32xf32>
    %c2 = arith.constant 2 : index
    %c0_32 = arith.constant 0 : index
    %c0_33 = arith.constant 0 : index
    %80 = vector.load %arg8[%c2, %c0_32, %c0_33] : memref<4x32x32xf32, #tpu.memory_space<vmem>>, vector<1x32x32xf32>
    %81 = vector.shape_cast %80 : vector<1x32x32xf32> to vector<32x32xf32>
    %cst_34 = arith.constant dense<0.000000e+00> : vector<16x32xf32>
    %82 = tpu.matmul %70, %81, %cst_34 {dimension_numbers = #tpu.dot_dimension_numbers<[1], [0], [0], [1], [0, 0, 1, 1], [], []>} : vector<16x32xf32>, vector<32x32xf32>, vector<16x32xf32> -> vector<16x32xf32>
    %83 = arith.addf %79, %82 : vector<16x32xf32>
    %c3 = arith.constant 3 : index
    %c0_35 = arith.constant 0 : index
    %c0_36 = arith.constant 0 : index
    %84 = vector.load %arg8[%c3, %c0_35, %c0_36] : memref<4x32x32xf32, #tpu.memory_space<vmem>>, vector<1x32x32xf32>
    %85 = vector.shape_cast %84 : vector<1x32x32xf32> to vector<32x32xf32>
    %cst_37 = arith.constant dense<0.000000e+00> : vector<16x32xf32>
    %86 = tpu.matmul %71, %85, %cst_37 {dimension_numbers = #tpu.dot_dimension_numbers<[1], [0], [0], [1], [0, 0, 1, 1], [], []>} : vector<16x32xf32>, vector<32x32xf32>, vector<16x32xf32> -> vector<16x32xf32>
    %87 = arith.addf %83, %86 : vector<16x32xf32>
    %c0_38 = arith.constant 0 : index
    %c0_39 = arith.constant 0 : index
    %88 = vector.load %arg12[%c0_38, %c0_39] : memref<16x1xf32, #tpu.memory_space<vmem>>, vector<16x1xf32>
    %89 = vector.broadcast %88 : vector<16x1xf32> to vector<16x32xf32>
    %90 = arith.addf %87, %89 : vector<16x32xf32>
    %91 = vector.extract_strided_slice %90 {offsets = [0, 0], sizes = [16, 16], strides = [1, 1]} : vector<16x32xf32> to vector<16x16xf32>
    %c0_40 = arith.constant 0 : index
    %c0_41 = arith.constant 0 : index
    %92 = vector.load %arg5[%c0_40, %c0_41] : memref<16x256xf32, #tpu.memory_space<vmem>>, vector<16x256xf32>
    %cst_42 = arith.constant dense<0.000000e+00> : vector<16x256xf32>
    %93 = tpu.matmul %91, %92, %cst_42 {dimension_numbers = #tpu.dot_dimension_numbers<[1], [0], [0], [1], [0, 0, 1, 1], [], []>} : vector<16x16xf32>, vector<16x256xf32>, vector<16x256xf32> -> vector<16x256xf32>
    %94 = vector.extract_strided_slice %90 {offsets = [0, 16], sizes = [16, 16], strides = [1, 1]} : vector<16x32xf32> to vector<16x16xf32>
    %c0_43 = arith.constant 0 : index
    %c0_44 = arith.constant 0 : index
    %95 = vector.load %arg6[%c0_43, %c0_44] : memref<16x256xf32, #tpu.memory_space<vmem>>, vector<16x256xf32>
    %cst_45 = arith.constant dense<0.000000e+00> : vector<16x256xf32>
    %96 = tpu.matmul %94, %95, %cst_45 {dimension_numbers = #tpu.dot_dimension_numbers<[1], [0], [0], [1], [0, 0, 1, 1], [], []>} : vector<16x16xf32>, vector<16x256xf32>, vector<16x256xf32> -> vector<16x256xf32>
    %97 = arith.mulf %93, %96 : vector<16x256xf32>
    %98 = arith.negf %97 : vector<16x256xf32>
    %99 = math.exp %98 : vector<16x256xf32>
    %cst_46 = arith.constant 1.000000e+00 : f32
    %100 = vector.broadcast %cst_46 : f32 to vector<16x256xf32>
    %101 = arith.addf %100, %99 : vector<16x256xf32>
    %102 = arith.divf %100, %101 : vector<16x256xf32>
    %cst_47 = arith.constant 1.000000e+00 : f32
    %103 = vector.broadcast %cst_47 : f32 to vector<16x256xf32>
    %104 = arith.addf %102, %103 : vector<16x256xf32>
    %105 = arith.mulf %0, %104 : vector<16x256xf32>
    %c0_48 = arith.constant 0 : index
    %c0_49 = arith.constant 0 : index
    %106 = vector.load %arg13[%c0_48, %c0_49] : memref<16x256xf32, #tpu.memory_space<vmem>>, vector<16x256xf32>
    tpu.vector_store %arg13[%c0_48, %c0_49], %105 {strides = array<i32>} : memref<16x256xf32, #tpu.memory_space<vmem>>, vector<16x256xf32>,
    return
  }
  func.func @transform_0(%arg0: i32) -> (i32, i32) {
    %c0_i32 = arith.constant 0 : i32
    %c0_i32_0 = arith.constant 0 : i32
    return %arg0, %c0_i32 : i32, i32
  }
  func.func @transform_1(%arg0: i32) -> (i32, i32) {
    %c0_i32 = arith.constant 0 : i32
    %c0_i32_0 = arith.constant 0 : i32
    %c0_i32_1 = arith.constant 0 : i32
    return %c0_i32, %c0_i32_0 : i32, i32
  }
  func.func @transform_2(%arg0: i32) -> (i32, i32) {
    %c0_i32 = arith.constant 0 : i32
    %c0_i32_0 = arith.constant 0 : i32
    %c0_i32_1 = arith.constant 0 : i32
    return %c0_i32, %c0_i32_0 : i32, i32
  }
  func.func @transform_3(%arg0: i32) -> (i32, i32) {
    %c0_i32 = arith.constant 0 : i32
    %c0_i32_0 = arith.constant 0 : i32
    %c0_i32_1 = arith.constant 0 : i32
    return %c0_i32, %c0_i32_0 : i32, i32
  }
  func.func @transform_4(%arg0: i32) -> (i32, i32) {
    %c0_i32 = arith.constant 0 : i32
    %c0_i32_0 = arith.constant 0 : i32
    %c0_i32_1 = arith.constant 0 : i32
    return %c0_i32, %c0_i32_0 : i32, i32
  }
  func.func @transform_5(%arg0: i32) -> (i32, i32) {
    %c0_i32 = arith.constant 0 : i32
    %c0_i32_0 = arith.constant 0 : i32
    %c0_i32_1 = arith.constant 0 : i32
    return %c0_i32, %c0_i32_0 : i32, i32
  }
  func.func @transform_6(%arg0: i32) -> (i32, i32) {
    %c0_i32 = arith.constant 0 : i32
    %c0_i32_0 = arith.constant 0 : i32
    %c0_i32_1 = arith.constant 0 : i32
    return %c0_i32, %c0_i32_0 : i32, i32
  }
  func.func @transform_7(%arg0: i32) -> (i32, i32, i32) {
    %c0_i32 = arith.constant 0 : i32
    %c0_i32_0 = arith.constant 0 : i32
    %c0_i32_1 = arith.constant 0 : i32
    %c0_i32_2 = arith.constant 0 : i32
    return %c0_i32, %c0_i32_0, %c0_i32_1 : i32, i32, i32
  }
  func.func @transform_8(%arg0: i32) -> (i32, i32) {
    %c0_i32 = arith.constant 0 : i32
    %c0_i32_0 = arith.constant 0 : i32
    %c0_i32_1 = arith.constant 0 : i32
    return %c0_i32, %c0_i32_0 : i32, i32
  }
  func.func @transform_9(%arg0: i32) -> (i32, i32) {
    %c0_i32 = arith.constant 0 : i32
    %c0_i32_0 = arith.constant 0 : i32
    %c0_i32_1 = arith.constant 0 : i32
    return %c0_i32, %c0_i32_0 : i32, i32
  }
  func.func @transform_10(%arg0: i32) -> (i32, i32) {
    %c0_i32 = arith.constant 0 : i32
    %c0_i32_0 = arith.constant 0 : i32
    %c0_i32_1 = arith.constant 0 : i32
    return %c0_i32, %c0_i32_0 : i32, i32
  }
  func.func @transform_11(%arg0: i32) -> (i32, i32) {
    %c0_i32 = arith.constant 0 : i32
    %c0_i32_0 = arith.constant 0 : i32
    %c0_i32_1 = arith.constant 0 : i32
    return %c0_i32, %c0_i32_0 : i32, i32
  }
  func.func @transform_12(%arg0: i32) -> (i32, i32) {
    %c0_i32 = arith.constant 0 : i32
    %c0_i32_0 = arith.constant 0 : i32
    return %arg0, %c0_i32 : i32, i32
  }
}

</mosaic_0001>

<llo_original>
// kernel: tpu_custom_call.1
$region0: #{tpu_custom_call.1}
  #allocation0 [shape = 'u32[]', space=smem, size = 0x4, offset = 0x4, fixed_abs, tag = 'smem constant byte address 0x4 - core index']
  #allocation1 [shape = 'u32[72,128]{1,0:T(1,128)}', space=vmem, size = 0x9000, scoped, tag = 'internal scratch']
  %s0 = inlined_call_operand.vmem [shape: f32[32,256], index: 0, kind: input, shape index: {}]
  %s1 = inlined_call_operand.vmem [shape: f32[256,32], index: 1, kind: input, shape index: {}]
  %s2 = inlined_call_operand.vmem [shape: f32[256,32], index: 2, kind: input, shape index: {}]
  %s3 = inlined_call_operand.vmem [shape: f32[256,16], index: 3, kind: input, shape index: {}]
  %s4 = inlined_call_operand.vmem [shape: f32[16,256], index: 4, kind: input, shape index: {}]
  %s5 = inlined_call_operand.vmem [shape: f32[16,256], index: 5, kind: input, shape index: {}]
  %s6 = inlined_call_operand.vmem [shape: f32[8,256], index: 6, kind: input, shape index: {}]
  %s7 = inlined_call_operand.vmem [shape: f32[4,32,32], index: 7, kind: input, shape index: {}]
  %s8 = inlined_call_operand.vmem [shape: f32[4,16], index: 8, kind: input, shape index: {}]
  %s9 = inlined_call_operand.vmem [shape: f32[4,1], index: 9, kind: input, shape index: {}]
  %s10 = inlined_call_operand.vmem [shape: f32[80,4], index: 10, kind: input, shape index: {}]
  %s11 = inlined_call_operand.vmem [shape: f32[16,1], index: 11, kind: input, shape index: {}]
  %s12 = inlined_call_operand.hbm [shape: f32[32,256], index: 12, kind: output, shape index: {}]
  %s13 = sld [smem:[#allocation0]]
  $region81: #{tpu_custom_call.1} parent=0
    _
  %s15 = ssub.s32 1, %s13
  %s16 = scalar_select 0, %s15, %s13
  $region1: #{tpu_custom_call.1} parent=0
    #allocation2 [shape = 'u8[32768]{0}', space=vmem, size = 0x8000, scoped, tag = 'output window, operand 0']
    #allocation3 [shape = 's32[2]{0}', space=sflag, size = 0x8, scoped, tag = 'scoped memory for tpu_custom_call.1']
    %17 = vsyncpa [#allocation3], 0
    %s18 = scalar_lea.sflag [#allocation3], 1
    %19 = vsyncpa %s18, 0
    loop: start=0, step=1, limit=4
    $region2: #{tpu_custom_call.1} parent=1 // loop_pre_header
      _
    $region3: #{tpu_custom_call.1} parent=1 // loop_header
      %s21 = sphi 0, %s25
      %p22 = scmp.ge.s32.totalorder %s21, 4
      %s31 = sphi 0, %s33
      %s34 = sphi 0, %s31
      %s35 = sphi 0, %s34
      %s51 = sphi 0, %s35
      %s55 = sphi 0, %s55
      %s57 = sphi 0, %s55
      %s58 = sphi 0, %s57
      %s72 = sphi 0, %s58
      %s76 = sphi 0, %s76
      %s78 = sphi 0, %s76
      %s79 = sphi 0, %s78
      %s93 = sphi 0, %s79
      %s97 = sphi 0, %s97
      %s99 = sphi 0, %s97
      %s100 = sphi 0, %s99
      %s114 = sphi 0, %s100
      %s118 = sphi 0, %s118
      %s120 = sphi 0, %s118
      %s121 = sphi 0, %s120
      %s135 = sphi 0, %s121
      %s139 = sphi 0, %s139
      %s141 = sphi 0, %s139
      %s142 = sphi 0, %s141
      %s156 = sphi 0, %s142
      %s160 = sphi 0, %s160
      %s162 = sphi 0, %s160
      %s163 = sphi 0, %s162
      %s177 = sphi 0, %s163
      %s181 = sphi 0, %s181
      %s183 = sphi 0, %s181
      %s184 = sphi 0, %s183
      %s198 = sphi 0, %s184
      %s202 = sphi 0, %s202
      %s204 = sphi 0, %s202
      %s205 = sphi 0, %s204
      %s219 = sphi 0, %s205
      %s223 = sphi 0, %s223
      %s225 = sphi 0, %s223
      %s226 = sphi 0, %s225
      %s240 = sphi 0, %s226
      %s244 = sphi 0, %s244
      %s246 = sphi 0, %s244
      %s247 = sphi 0, %s246
      %s261 = sphi 0, %s247
      %s265 = sphi 0, %s265
      %s267 = sphi 0, %s265
      %s268 = sphi 0, %s267
      %s282 = sphi 0, %s268
      %s288 = sphi 0, %s290
      %s291 = sphi 0, %s288
      %s292 = sphi 0, %s291
      %s308 = sphi 0, %s292
    $region4: #{tpu_custom_call.1} parent=1 // loop_header_branch
      %24 = sbr.rel (%p22) target = $region8
    $region5: #{tpu_custom_call.1} parent=1 // loop_body
      %s26 = ssub.s32 %s21, 1
      %s27 = ssub.s32 %s21, 2
      %s28 = sadd.s32 %s21, 1
      %s29 = ssub.s32 %s21, %s28
      %p30 = scmp.eq.s32.totalorder %s29, 0
      %s32 = sadd.s32 %s31, 1
      %s33 = scalar_select %p30, %s31, %s32
      %p36 = pneg %p30
      %p37 = scmp.eq.s32.totalorder %s21, 1
      %p38 = por %p36, %p37
      %p39 = scmp.ne.s32.totalorder %s31, %s34
      %p40 = scmp.eq.s32.totalorder %s21, 0
      %p41 = por %p39, %p40
      %p42 = scmp.ne.s32.totalorder %s31, %s34
      %p43 = scmp.eq.s32.totalorder %s26, 1
      %p44 = por %p42, %p43
      %p45 = scmp.ne.s32.totalorder %s34, %s35
      %p46 = scmp.eq.s32.totalorder %s26, 0
      %p47 = por %p45, %p46
      %p48 = scmp.ne.s32.totalorder %s34, %s35
      %p49 = scmp.eq.s32.totalorder %s27, 1
      %p50 = por %p48, %p49
      %p52 = scmp.ne.s32.totalorder %s35, %s51
      %p53 = scmp.eq.s32.totalorder %s27, 0
      %p54 = por %p52, %p53
      %s56 = sadd.s32 %s55, 1
      %p59 = scmp.eq.s32.totalorder %s21, 1
      %p60 = scmp.ne.s32.totalorder %s55, %s57
      %p61 = scmp.eq.s32.totalorder %s21, 0
      %p62 = por %p60, %p61
      %p63 = scmp.ne.s32.totalorder %s55, %s57
      %p64 = scmp.eq.s32.totalorder %s26, 1
      %p65 = por %p63, %p64
      %p66 = scmp.ne.s32.totalorder %s57, %s58
      %p67 = scmp.eq.s32.totalorder %s26, 0
      %p68 = por %p66, %p67
      %p69 = scmp.ne.s32.totalorder %s57, %s58
      %p70 = scmp.eq.s32.totalorder %s27, 1
      %p71 = por %p69, %p70
      %p73 = scmp.ne.s32.totalorder %s58, %s72
      %p74 = scmp.eq.s32.totalorder %s27, 0
      %p75 = por %p73, %p74
      %s77 = sadd.s32 %s76, 1
      %p80 = scmp.eq.s32.totalorder %s21, 1
      %p81 = scmp.ne.s32.totalorder %s76, %s78
      %p82 = scmp.eq.s32.totalorder %s21, 0
      %p83 = por %p81, %p82
      %p84 = scmp.ne.s32.totalorder %s76, %s78
      %p85 = scmp.eq.s32.totalorder %s26, 1
      %p86 = por %p84, %p85
      %p87 = scmp.ne.s32.totalorder %s78, %s79
      %p88 = scmp.eq.s32.totalorder %s26, 0
      %p89 = por %p87, %p88
      %p90 = scmp.ne.s32.totalorder %s78, %s79
      %p91 = scmp.eq.s32.totalorder %s27, 1
      %p92 = por %p90, %p91
      %p94 = scmp.ne.s32.totalorder %s79, %s93
      %p95 = scmp.eq.s32.totalorder %s27, 0
      %p96 = por %p94, %p95
      %s98 = sadd.s32 %s97, 1
      %p101 = scmp.eq.s32.totalorder %s21, 1
      %p102 = scmp.ne.s32.totalorder %s97, %s99
      %p103 = scmp.eq.s32.totalorder %s21, 0
      %p104 = por %p102, %p103
      %p105 = scmp.ne.s32.totalorder %s97, %s99
      %p106 = scmp.eq.s32.totalorder %s26, 1
      %p107 = por %p105, %p106
      %p108 = scmp.ne.s32.totalorder %s99, %s100
      %p109 = scmp.eq.s32.totalorder %s26, 0
      %p110 = por %p108, %p109
      %p111 = scmp.ne.s32.totalorder %s99, %s100
      %p112 = scmp.eq.s32.totalorder %s27, 1
      %p113 = por %p111, %p112
      %p115 = scmp.ne.s32.totalorder %s100, %s114
      %p116 = scmp.eq.s32.totalorder %s27, 0
      %p117 = por %p115, %p116
      %s119 = sadd.s32 %s118, 1
      %p122 = scmp.eq.s32.totalorder %s21, 1
      %p123 = scmp.ne.s32.totalorder %s118, %s120
      %p124 = scmp.eq.s32.totalorder %s21, 0
      %p125 = por %p123, %p124
      %p126 = scmp.ne.s32.totalorder %s118, %s120
      %p127 = scmp.eq.s32.totalorder %s26, 1
      %p128 = por %p126, %p127
      %p129 = scmp.ne.s32.totalorder %s120, %s121
      %p130 = scmp.eq.s32.totalorder %s26, 0
      %p131 = por %p129, %p130
      %p132 = scmp.ne.s32.totalorder %s120, %s121
      %p133 = scmp.eq.s32.totalorder %s27, 1
      %p134 = por %p132, %p133
      %p136 = scmp.ne.s32.totalorder %s121, %s135
      %p137 = scmp.eq.s32.totalorder %s27, 0
      %p138 = por %p136, %p137
      %s140 = sadd.s32 %s139, 1
      %p143 = scmp.eq.s32.totalorder %s21, 1
      %p144 = scmp.ne.s32.totalorder %s139, %s141
      %p145 = scmp.eq.s32.totalorder %s21, 0
      %p146 = por %p144, %p145
      %p147 = scmp.ne.s32.totalorder %s139, %s141
      %p148 = scmp.eq.s32.totalorder %s26, 1
      %p149 = por %p147, %p148
      %p150 = scmp.ne.s32.totalorder %s141, %s142
      %p151 = scmp.eq.s32.totalorder %s26, 0
      %p152 = por %p150, %p151
      %p153 = scmp.ne.s32.totalorder %s141, %s142
      %p154 = scmp.eq.s32.totalorder %s27, 1
      %p155 = por %p153, %p154
      %p157 = scmp.ne.s32.totalorder %s142, %s156
      %p158 = scmp.eq.s32.totalorder %s27, 0
      %p159 = por %p157, %p158
      %s161 = sadd.s32 %s160, 1
      %p164 = scmp.eq.s32.totalorder %s21, 1
      %p165 = scmp.ne.s32.totalorder %s160, %s162
      %p166 = scmp.eq.s32.totalorder %s21, 0
      %p167 = por %p165, %p166
      %p168 = scmp.ne.s32.totalorder %s160, %s162
      %p169 = scmp.eq.s32.totalorder %s26, 1
      %p170 = por %p168, %p169
      %p171 = scmp.ne.s32.totalorder %s162, %s163
      %p172 = scmp.eq.s32.totalorder %s26, 0
      %p173 = por %p171, %p172
      %p174 = scmp.ne.s32.totalorder %s162, %s163
      %p175 = scmp.eq.s32.totalorder %s27, 1
      %p176 = por %p174, %p175
      %p178 = scmp.ne.s32.totalorder %s163, %s177
      %p179 = scmp.eq.s32.totalorder %s27, 0
      %p180 = por %p178, %p179
      %s182 = sadd.s32 %s181, 1
      %p185 = scmp.eq.s32.totalorder %s21, 1
      %p186 = scmp.ne.s32.totalorder %s181, %s183
      %p187 = scmp.eq.s32.totalorder %s21, 0
      %p188 = por %p186, %p187
      %p189 = scmp.ne.s32.totalorder %s181, %s183
      %p190 = scmp.eq.s32.totalorder %s26, 1
      %p191 = por %p189, %p190
      %p192 = scmp.ne.s32.totalorder %s183, %s184
      %p193 = scmp.eq.s32.totalorder %s26, 0
      %p194 = por %p192, %p193
      %p195 = scmp.ne.s32.totalorder %s183, %s184
      %p196 = scmp.eq.s32.totalorder %s27, 1
      %p197 = por %p195, %p196
      %p199 = scmp.ne.s32.totalorder %s184, %s198
      %p200 = scmp.eq.s32.totalorder %s27, 0
      %p201 = por %p199, %p200
      %s203 = sadd.s32 %s202, 1
      %p206 = scmp.eq.s32.totalorder %s21, 1
      %p207 = scmp.ne.s32.totalorder %s202, %s204
      %p208 = scmp.eq.s32.totalorder %s21, 0
      %p209 = por %p207, %p208
      %p210 = scmp.ne.s32.totalorder %s202, %s204
      %p211 = scmp.eq.s32.totalorder %s26, 1
      %p212 = por %p210, %p211
      %p213 = scmp.ne.s32.totalorder %s204, %s205
      %p214 = scmp.eq.s32.totalorder %s26, 0
      %p215 = por %p213, %p214
      %p216 = scmp.ne.s32.totalorder %s204, %s205
      %p217 = scmp.eq.s32.totalorder %s27, 1
      %p218 = por %p216, %p217
      %p220 = scmp.ne.s32.totalorder %s205, %s219
      %p221 = scmp.eq.s32.totalorder %s27, 0
      %p222 = por %p220, %p221
      %s224 = sadd.s32 %s223, 1
      %p227 = scmp.eq.s32.totalorder %s21, 1
      %p228 = scmp.ne.s32.totalorder %s223, %s225
      %p229 = scmp.eq.s32.totalorder %s21, 0
      %p230 = por %p228, %p229
      %p231 = scmp.ne.s32.totalorder %s223, %s225
      %p232 = scmp.eq.s32.totalorder %s26, 1
      %p233 = por %p231, %p232
      %p234 = scmp.ne.s32.totalorder %s225, %s226
      %p235 = scmp.eq.s32.totalorder %s26, 0
      %p236 = por %p234, %p235
      %p237 = scmp.ne.s32.totalorder %s225, %s226
      %p238 = scmp.eq.s32.totalorder %s27, 1
      %p239 = por %p237, %p238
      %p241 = scmp.ne.s32.totalorder %s226, %s240
      %p242 = scmp.eq.s32.totalorder %s27, 0
      %p243 = por %p241, %p242
      %s245 = sadd.s32 %s244, 1
      %p248 = scmp.eq.s32.totalorder %s21, 1
      %p249 = scmp.ne.s32.totalorder %s244, %s246
      %p250 = scmp.eq.s32.totalorder %s21, 0
      %p251 = por %p249, %p250
      %p252 = scmp.ne.s32.totalorder %s244, %s246
      %p253 = scmp.eq.s32.totalorder %s26, 1
      %p254 = por %p252, %p253
      %p255 = scmp.ne.s32.totalorder %s246, %s247
      %p256 = scmp.eq.s32.totalorder %s26, 0
      %p257 = por %p255, %p256
      %p258 = scmp.ne.s32.totalorder %s246, %s247
      %p259 = scmp.eq.s32.totalorder %s27, 1
      %p260 = por %p258, %p259
      %p262 = scmp.ne.s32.totalorder %s247, %s261
      %p263 = scmp.eq.s32.totalorder %s27, 0
      %p264 = por %p262, %p263
      %s266 = sadd.s32 %s265, 1
      %p269 = scmp.eq.s32.totalorder %s21, 1
      %p270 = scmp.ne.s32.totalorder %s265, %s267
      %p271 = scmp.eq.s32.totalorder %s21, 0
      %p272 = por %p270, %p271
      %p273 = scmp.ne.s32.totalorder %s265, %s267
      %p274 = scmp.eq.s32.totalorder %s26, 1
      %p275 = por %p273, %p274
      %p276 = scmp.ne.s32.totalorder %s267, %s268
      %p277 = scmp.eq.s32.totalorder %s26, 0
      %p278 = por %p276, %p277
      %p279 = scmp.ne.s32.totalorder %s267, %s268
      %p280 = scmp.eq.s32.totalorder %s27, 1
      %p281 = por %p279, %p280
      %p283 = scmp.ne.s32.totalorder %s268, %s282
      %p284 = scmp.eq.s32.totalorder %s27, 0
      %p285 = por %p283, %p284
      %s286 = ssub.s32 %s21, %s28
      %p287 = scmp.eq.s32.totalorder %s286, 0
      %s289 = sadd.s32 %s288, 1
      %s290 = scalar_select %p287, %s288, %s289
      %p293 = pneg %p287
      %p294 = scmp.eq.s32.totalorder %s21, 1
      %p295 = por %p293, %p294
      %p296 = scmp.ne.s32.totalorder %s288, %s291
      %p297 = scmp.eq.s32.totalorder %s21, 0
      %p298 = por %p296, %p297
      %p299 = scmp.ne.s32.totalorder %s288, %s291
      %p300 = scmp.eq.s32.totalorder %s26, 1
      %p301 = por %p299, %p300
      %p302 = scmp.ne.s32.totalorder %s291, %s292
      %p303 = scmp.eq.s32.totalorder %s26, 0
      %p304 = por %p302, %p303
      %p305 = scmp.ne.s32.totalorder %s291, %s292
      %p306 = scmp.eq.s32.totalorder %s27, 1
      %p307 = por %p305, %p306
      %p309 = scmp.ne.s32.totalorder %s292, %s308
      %p310 = scmp.eq.s32.totalorder %s27, 0
      %p311 = por %p309, %p310
      %p312 = scmp.le.s32.totalorder 1, %s21
      %p313 = scmp.lt.s32.totalorder %s21, 3
      %p314 = pnand %p312, %p313
      %p315 = pneg %p314
      // Predicated region
      $region9: #{tpu_custom_call.1} parent=5 // pred_check
        _
      $region10: #{tpu_custom_call.1} parent=5 // pred_check_branch
        %317 = sbr.rel (%p314) target = $region12
      $region11: #{tpu_custom_call.1} parent=5 // pred_region
        %s318 = ssub.s32 %s21, 1
        // Predicated region
        $region13: #{tpu_custom_call.1} parent=11 // pred_check
          %p319 = pneg %p68
        $region14: #{tpu_custom_call.1} parent=11 // pred_check_branch
          %321 = sbr.rel (%p319) target = $region16
        $region15: #{tpu_custom_call.1} parent=11 // pred_region
          _
        $region16: #{tpu_custom_call.1} parent=11 // pred_fallthru
          _
        // Predicated region
        $region17: #{tpu_custom_call.1} parent=11 // pred_check
          %p322 = pneg %p89
        $region18: #{tpu_custom_call.1} parent=11 // pred_check_branch
          %324 = sbr.rel (%p322) target = $region20
        $region19: #{tpu_custom_call.1} parent=11 // pred_region
          _
        $region20: #{tpu_custom_call.1} parent=11 // pred_fallthru
          _
        // Predicated region
        $region21: #{tpu_custom_call.1} parent=11 // pred_check
          %p325 = pneg %p110
        $region22: #{tpu_custom_call.1} parent=11 // pred_check_branch
          %327 = sbr.rel (%p325) target = $region24
        $region23: #{tpu_custom_call.1} parent=11 // pred_region
          _
        $region24: #{tpu_custom_call.1} parent=11 // pred_fallthru
          _
        // Predicated region
        $region25: #{tpu_custom_call.1} parent=11 // pred_check
          %p328 = pneg %p131
        $region26: #{tpu_custom_call.1} parent=11 // pred_check_branch
          %330 = sbr.rel (%p328) target = $region28
        $region27: #{tpu_custom_call.1} parent=11 // pred_region
          _
        $region28: #{tpu_custom_call.1} parent=11 // pred_fallthru
          _
        // Predicated region
        $region29: #{tpu_custom_call.1} parent=11 // pred_check
          %p331 = pneg %p152
        $region30: #{tpu_custom_call.1} parent=11 // pred_check_branch
          %333 = sbr.rel (%p331) target = $region32
        $region31: #{tpu_custom_call.1} parent=11 // pred_region
          _
        $region32: #{tpu_custom_call.1} parent=11 // pred_fallthru
          _
        // Predicated region
        $region33: #{tpu_custom_call.1} parent=11 // pred_check
          %p334 = pneg %p173
        $region34: #{tpu_custom_call.1} parent=11 // pred_check_branch
          %336 = sbr.rel (%p334) target = $region36
        $region35: #{tpu_custom_call.1} parent=11 // pred_region
          _
        $region36: #{tpu_custom_call.1} parent=11 // pred_fallthru
          _
        // Predicated region
        $region37: #{tpu_custom_call.1} parent=11 // pred_check
          %p337 = pneg %p194
        $region38: #{tpu_custom_call.1} parent=11 // pred_check_branch
          %339 = sbr.rel (%p337) target = $region40
        $region39: #{tpu_custom_call.1} parent=11 // pred_region
          _
        $region40: #{tpu_custom_call.1} parent=11 // pred_fallthru
          _
        // Predicated region
        $region41: #{tpu_custom_call.1} parent=11 // pred_check
          %p340 = pneg %p215
        $region42: #{tpu_custom_call.1} parent=11 // pred_check_branch
          %342 = sbr.rel (%p340) target = $region44
        $region43: #{tpu_custom_call.1} parent=11 // pred_region
          _
        $region44: #{tpu_custom_call.1} parent=11 // pred_fallthru
          _
        // Predicated region
        $region45: #{tpu_custom_call.1} parent=11 // pred_check
          %p343 = pneg %p236
        $region46: #{tpu_custom_call.1} parent=11 // pred_check_branch
          %345 = sbr.rel (%p343) target = $region48
        $region47: #{tpu_custom_call.1} parent=11 // pred_region
          _
        $region48: #{tpu_custom_call.1} parent=11 // pred_fallthru
          _
        // Predicated region
        $region49: #{tpu_custom_call.1} parent=11 // pred_check
          %p346 = pneg %p257
        $region50: #{tpu_custom_call.1} parent=11 // pred_check_branch
          %348 = sbr.rel (%p346) target = $region52
        $region51: #{tpu_custom_call.1} parent=11 // pred_region
          _
        $region52: #{tpu_custom_call.1} parent=11 // pred_fallthru
          _
        // Predicated region
        $region53: #{tpu_custom_call.1} parent=11 // pred_check
          %p349 = pneg %p278
        $region54: #{tpu_custom_call.1} parent=11 // pred_check_branch
          %351 = sbr.rel (%p349) target = $region56
        $region55: #{tpu_custom_call.1} parent=11 // pred_region
          _
        $region56: #{tpu_custom_call.1} parent=11 // pred_fallthru
          _
      $region12: #{tpu_custom_call.1} parent=5 // pred_fallthru
        _
      %p352 = scmp.lt.s32.totalorder %s21, 2
      // Predicated region
      $region57: #{tpu_custom_call.1} parent=5 // pred_check
        %p353 = pneg %p352
      $region58: #{tpu_custom_call.1} parent=5 // pred_check_branch
        %355 = sbr.rel (%p353) target = $region60
      $region59: #{tpu_custom_call.1} parent=5 // pred_region
        // Predicated region
        $region61: #{tpu_custom_call.1} parent=59 // pred_check
          %p356 = pneg %p41
        $region62: #{tpu_custom_call.1} parent=59 // pred_check_branch
          %358 = sbr.rel (%p356) target = $region64
        $region63: #{tpu_custom_call.1} parent=59 // pred_region
          %s359 = smul.u32 2, %s21
          %p360 = scmp.lt.s32.totalorder %s359, 3
          %s361 = scalar_select %p360, %s359, 3
          %s362 = smul.addr %s361, 2
          %s363 = smul.addr %s362, 8
          %s364 = scalar_lea.vmem %s0, %s363
          %s365 = smul.u32 2, %s21
        $region64: #{tpu_custom_call.1} parent=59 // pred_fallthru
          _
      $region60: #{tpu_custom_call.1} parent=5 // pred_fallthru
        _
      %p366 = scmp.le.s32.totalorder 1, %s21
      %p367 = scmp.lt.s32.totalorder %s21, 3
      %p368 = pnand %p366, %p367
      %p369 = pneg %p368
      // Predicated region
      $region65: #{tpu_custom_call.1} parent=5 // pred_check
        _
      $region66: #{tpu_custom_call.1} parent=5 // pred_check_branch
        %371 = sbr.rel (%p368) target = $region68
      $region67: #{tpu_custom_call.1} parent=5 // pred_region
        %s372 = ssub.s32 %s21, 1
        %s373 = smul.u32 2, %s26
        %p374 = scmp.lt.s32.totalorder %s373, 3
        %s375 = scalar_select %p374, %s373, 3
        %s376 = smul.addr %s375, 2
        %s377 = smul.addr %s376, 8
        %s378 = scalar_lea.vmem %s0, %s377
        %p379 = pneg %p47
        %p380 = pneg %p44
        %p381 = pneg %p68
        %p382 = pneg %p65
        %p383 = pneg %p89
        %p384 = pneg %p86
        %p385 = pneg %p110
        %p386 = pneg %p107
        %p387 = pneg %p131
        %p388 = pneg %p128
        %p389 = pneg %p152
        %p390 = pneg %p149
        %p391 = pneg %p173
        %p392 = pneg %p170
        %p393 = pneg %p194
        %p394 = pneg %p191
        %p395 = pneg %p215
        %p396 = pneg %p212
        %p397 = pneg %p236
        %p398 = pneg %p233
        %p399 = pneg %p257
        %p400 = pneg %p254
        %p401 = pneg %p278
        %p402 = pneg %p275
        %p403 = pneg %p304
        %p404 = pneg %p301
        %s405 = sand.u32 %s291, 1
        %s406 = scalar_lea.sflag [#allocation3], %s405
        %s407 = sand.u32 %s291, 1
        %s408 = smul.addr %s407, 32
        %s409 = scalar_lea.vmem [#allocation2], %s408
        %s410 = smul.u32 2, %s26
        %p411 = scmp.lt.s32.totalorder %s410, 3
        %s412 = scalar_select %p411, %s410, 3
        %s413 = smul.addr %s412, 2
        %s414 = smul.addr %s413, 8
        %s415 = scalar_lea.vmem %s0, %s414
        %s416 = smul.u32 2, %s26
        %s417 = smul.u32 2, %s26
        %v418 = vld [vmem:[%s415] sm:$0xff]
        %v419 = vld [vmem:[%s415 + $0x8] sm:$0xff]
        %v420 = vld [vmem:[%s415 + $0x10] sm:$0xff]
        %v421 = vld [vmem:[%s415 + $0x18] sm:$0xff]
        %v422 = vld [vmem:[%s6] sm:$0xff]
        %v423 = vld [vmem:[%s6 + $0x8] sm:$0xff]
        %v424 = vperm.slane %v422, 0
        %v425 = vperm.slane %v423, 0
        %426 = vrot.lane.b32.xlu0 %v422, 1
        %v427 = vpop.permute.xlu0 %426
        %428 = vrot.lane.b32.xlu0 %v423, 1
        %v429 = vpop.permute.xlu0 %428
        %v430 = vlaneseq
        %v431 = vand.u32 %v430, 127
        %vm432 = vcmp.lt.s32.totalorder %v431, 1
        %v433 = vsel %vm432, %v427, %v429
        %v434 = vsel %vm432, %v429, %v427
        %v435 = vperm.slane %v434, 0
        %v436 = vperm.slane %v433, 0
        %vm437 = vcmp.eq.f32.partialorder %v435, %v424
        %vm438 = vcmp.eq.f32.partialorder %v436, %v425
        %439 = vrot.lane.b32.xlu0 %v418, 1
        %v440 = vpop.permute.xlu0 %439
        %441 = vrot.lane.b32.xlu0 %v420, 1
        %v442 = vpop.permute.xlu0 %441
        %443 = vrot.lane.b32.xlu0 %v419, 1
        %v444 = vpop.permute.xlu0 %443
        %445 = vrot.lane.b32.xlu0 %v421, 1
        %v446 = vpop.permute.xlu0 %445
        %v447 = vsel %vm432, %v440, %v444
        %v448 = vsel %vm432, %v442, %v446
        %v449 = vsel %vm432, %v444, %v440
        %v450 = vsel %vm432, %v446, %v442
        %v451 = vmax.f32 %v418, %v449
        %v452 = vmax.f32 %v419, %v447
        %v453 = vmax.f32 %v420, %v450
        %v454 = vmax.f32 %v421, %v448
        %v455 = vsel %vm437, %v451, %v418
        %v456 = vsel %vm438, %v452, %v419
        %v457 = vsel %vm437, %v453, %v420
        %v458 = vsel %vm438, %v454, %v421
        %459 = vrot.lane.b32.xlu0 %v422, 2
        %v460 = vpop.permute.xlu0 %459
        %461 = vrot.lane.b32.xlu0 %v423, 2
        %v462 = vpop.permute.xlu0 %461
        %vm463 = vcmp.lt.s32.totalorder %v431, 2
        %v464 = vsel %vm463, %v460, %v462
        %v465 = vsel %vm463, %v462, %v460
        %v466 = vperm.slane %v465, 0
        %v467 = vperm.slane %v464, 0
        %vm468 = vcmp.eq.f32.partialorder %v466, %v424
        %vm469 = vcmp.eq.f32.partialorder %v467, %v425
        %470 = vrot.lane.b32.xlu0 %v455, 2
        %v471 = vpop.permute.xlu0 %470
        %472 = vrot.lane.b32.xlu0 %v457, 2
        %v473 = vpop.permute.xlu0 %472
        %474 = vrot.lane.b32.xlu0 %v456, 2
        %v475 = vpop.permute.xlu0 %474
        %476 = vrot.lane.b32.xlu0 %v458, 2
        %v477 = vpop.permute.xlu0 %476
        %v478 = vsel %vm463, %v471, %v475
        %v479 = vsel %vm463, %v473, %v477
        %v480 = vsel %vm463, %v475, %v471
        %v481 = vsel %vm463, %v477, %v473
        %v482 = vmax.f32 %v455, %v480
        %v483 = vmax.f32 %v456, %v478
        %v484 = vmax.f32 %v457, %v481
        %v485 = vmax.f32 %v458, %v479
        %v486 = vsel %vm468, %v482, %v455
        %v487 = vsel %vm469, %v483, %v456
        %v488 = vsel %vm468, %v484, %v457
        %v489 = vsel %vm469, %v485, %v458
        %490 = vrot.lane.b32.xlu0 %v422, 4
        %v491 = vpop.permute.xlu0 %490
        %492 = vrot.lane.b32.xlu0 %v423, 4
        %v493 = vpop.permute.xlu0 %492
        %vm494 = vcmp.lt.s32.totalorder %v431, 4
        %v495 = vsel %vm494, %v491, %v493
        %v496 = vsel %vm494, %v493, %v491
        %v497 = vperm.slane %v496, 0
        %v498 = vperm.slane %v495, 0
        %vm499 = vcmp.eq.f32.partialorder %v497, %v424
        %vm500 = vcmp.eq.f32.partialorder %v498, %v425
        %501 = vrot.lane.b32.xlu0 %v486, 4
        %v502 = vpop.permute.xlu0 %501
        %503 = vrot.lane.b32.xlu0 %v488, 4
        %v504 = vpop.permute.xlu0 %503
        %505 = vrot.lane.b32.xlu0 %v487, 4
        %v506 = vpop.permute.xlu0 %505
        %507 = vrot.lane.b32.xlu0 %v489, 4
        %v508 = vpop.permute.xlu0 %507
        %v509 = vsel %vm494, %v502, %v506
        %v510 = vsel %vm494, %v504, %v508
        %v511 = vsel %vm494, %v506, %v502
        %v512 = vsel %vm494, %v508, %v504
        %v513 = vmax.f32 %v486, %v511
        %v514 = vmax.f32 %v487, %v509
        %v515 = vmax.f32 %v488, %v512
        %v516 = vmax.f32 %v489, %v510
        %v517 = vsel %vm499, %v513, %v486
        %v518 = vsel %vm500, %v514, %v487
        %v519 = vsel %vm499, %v515, %v488
        %v520 = vsel %vm500, %v516, %v489
        %521 = vrot.lane.b32.xlu0 %v422, 8
        %v522 = vpop.permute.xlu0 %521
        %523 = vrot.lane.b32.xlu0 %v423, 8
        %v524 = vpop.permute.xlu0 %523
        %vm525 = vcmp.lt.s32.totalorder %v431, 8
        %v526 = vsel %vm525, %v522, %v524
        %v527 = vsel %vm525, %v524, %v522
        %v528 = vperm.slane %v527, 0
        %v529 = vperm.slane %v526, 0
        %vm530 = vcmp.eq.f32.partialorder %v528, %v424
        %vm531 = vcmp.eq.f32.partialorder %v529, %v425
        %532 = vrot.lane.b32.xlu0 %v517, 8
        %v533 = vpop.permute.xlu0 %532
        %534 = vrot.lane.b32.xlu0 %v519, 8
        %v535 = vpop.permute.xlu0 %534
        %536 = vrot.lane.b32.xlu0 %v518, 8
        %v537 = vpop.permute.xlu0 %536
        %538 = vrot.lane.b32.xlu0 %v520, 8
        %v539 = vpop.permute.xlu0 %538
        %v540 = vsel %vm525, %v533, %v537
        %v541 = vsel %vm525, %v535, %v539
        %v542 = vsel %vm525, %v537, %v533
        %v543 = vsel %vm525, %v539, %v535
        %v544 = vmax.f32 %v517, %v542
        %v545 = vmax.f32 %v518, %v540
        %v546 = vmax.f32 %v519, %v543
        %v547 = vmax.f32 %v520, %v541
        %v548 = vsel %vm530, %v544, %v517
        %v549 = vsel %vm531, %v545, %v518
        %v550 = vsel %vm530, %v546, %v519
        %v551 = vsel %vm531, %v547, %v520
        %552 = vrot.lane.b32.xlu0 %v418, 16
        %v553 = vpop.permute.xlu0 %552
        %554 = vrot.lane.b32.xlu0 %v420, 16
        %v555 = vpop.permute.xlu0 %554
        %556 = vrot.lane.b32.xlu0 %v419, 16
        %v557 = vpop.permute.xlu0 %556
        %558 = vrot.lane.b32.xlu0 %v421, 16
        %v559 = vpop.permute.xlu0 %558
        %vm560 = vcmp.lt.s32.totalorder %v431, 16
        %v561 = vsel %vm560, %v553, %v557
        %v562 = vsel %vm560, %v555, %v559
        %v563 = vsel %vm560, %v557, %v553
        %v564 = vsel %vm560, %v559, %v555
        %v565 = vmax.f32 %v418, %v563
        %v566 = vmax.f32 %v419, %v561
        %v567 = vmax.f32 %v420, %v564
        %v568 = vmax.f32 %v421, %v562
        %569 = vrot.lane.b32.xlu0 %v565, 32
        %v570 = vpop.permute.xlu0 %569
        %571 = vrot.lane.b32.xlu0 %v567, 32
        %v572 = vpop.permute.xlu0 %571
        %573 = vrot.lane.b32.xlu0 %v566, 32
        %v574 = vpop.permute.xlu0 %573
        %575 = vrot.lane.b32.xlu0 %v568, 32
        %v576 = vpop.permute.xlu0 %575
        %vm577 = vcmp.lt.s32.totalorder %v431, 32
        %v578 = vsel %vm577, %v570, %v574
        %v579 = vsel %vm577, %v572, %v576
        %v580 = vsel %vm577, %v574, %v570
        %v581 = vsel %vm577, %v576, %v572
        %v582 = vmax.f32 %v565, %v580
        %v583 = vmax.f32 %v566, %v578
        %v584 = vmax.f32 %v567, %v581
        %v585 = vmax.f32 %v568, %v579
        %586 = vrot.lane.b32.xlu0 %v582, 64
        %v587 = vpop.permute.xlu0 %586
        %588 = vrot.lane.b32.xlu0 %v584, 64
        %v589 = vpop.permute.xlu0 %588
        %590 = vrot.lane.b32.xlu0 %v583, 64
        %v591 = vpop.permute.xlu0 %590
        %592 = vrot.lane.b32.xlu0 %v585, 64
        %v593 = vpop.permute.xlu0 %592
        %vm594 = vcmp.lt.s32.totalorder %v431, 64
        %v595 = vsel %vm594, %v587, %v591
        %v596 = vsel %vm594, %v589, %v593
        %v597 = vsel %vm594, %v591, %v587
        %v598 = vsel %vm594, %v593, %v589
        %v599 = vmax.f32 %v582, %v597
        %v600 = vmax.f32 %v583, %v595
        %v601 = vmax.f32 %v584, %v598
        %v602 = vmax.f32 %v585, %v596
        %v603 = vmax.f32 %v599, %v600
        %v604 = vmax.f32 %v601, %v602
        %v605 = vld [vmem:[%s1] sm:$0xff]
        %v606 = vld [vmem:[%s1 + $0x8] sm:$0xff]
        %v607 = vld [vmem:[%s1 + $0x10] sm:$0xff]
        %v608 = vld [vmem:[%s1 + $0x18] sm:$0xff]
        %v609 = vld [vmem:[%s1 + $0x20] sm:$0xff]
        %v610 = vld [vmem:[%s1 + $0x28] sm:$0xff]
        %v611 = vld [vmem:[%s1 + $0x30] sm:$0xff]
        %v612 = vld [vmem:[%s1 + $0x38] sm:$0xff]
        %v613 = vld [vmem:[%s1 + $0x40] sm:$0xff]
        %v614 = vld [vmem:[%s1 + $0x48] sm:$0xff]
        %v615 = vld [vmem:[%s1 + $0x50] sm:$0xff]
        %v616 = vld [vmem:[%s1 + $0x58] sm:$0xff]
        %v617 = vld [vmem:[%s1 + $0x60] sm:$0xff]
        %v618 = vld [vmem:[%s1 + $0x68] sm:$0xff]
        %v619 = vld [vmem:[%s1 + $0x70] sm:$0xff]
        %v620 = vld [vmem:[%s1 + $0x78] sm:$0xff]
        %v621 = vld [vmem:[%s1 + $0x80] sm:$0xff]
        %v622 = vld [vmem:[%s1 + $0x88] sm:$0xff]
        %v623 = vld [vmem:[%s1 + $0x90] sm:$0xff]
        %v624 = vld [vmem:[%s1 + $0x98] sm:$0xff]
        %v625 = vld [vmem:[%s1 + $0xa0] sm:$0xff]
        %v626 = vld [vmem:[%s1 + $0xa8] sm:$0xff]
        %v627 = vld [vmem:[%s1 + $0xb0] sm:$0xff]
        %v628 = vld [vmem:[%s1 + $0xb8] sm:$0xff]
        %v629 = vld [vmem:[%s1 + $0xc0] sm:$0xff]
        %v630 = vld [vmem:[%s1 + $0xc8] sm:$0xff]
        %v631 = vld [vmem:[%s1 + $0xd0] sm:$0xff]
        %v632 = vld [vmem:[%s1 + $0xd8] sm:$0xff]
        %v633 = vld [vmem:[%s1 + $0xe0] sm:$0xff]
        %v634 = vld [vmem:[%s1 + $0xe8] sm:$0xff]
        %v635 = vld [vmem:[%s1 + $0xf0] sm:$0xff]
        %v636 = vld [vmem:[%s1 + $0xf8] sm:$0xff]
        %v637 = vld [vmem:[%s2] sm:$0xff]
        %v638 = vld [vmem:[%s2 + $0x8] sm:$0xff]
        %v639 = vld [vmem:[%s2 + $0x10] sm:$0xff]
        %v640 = vld [vmem:[%s2 + $0x18] sm:$0xff]
        %v641 = vld [vmem:[%s2 + $0x20] sm:$0xff]
        %v642 = vld [vmem:[%s2 + $0x28] sm:$0xff]
        %v643 = vld [vmem:[%s2 + $0x30] sm:$0xff]
        %v644 = vld [vmem:[%s2 + $0x38] sm:$0xff]
        %v645 = vld [vmem:[%s2 + $0x40] sm:$0xff]
        %v646 = vld [vmem:[%s2 + $0x48] sm:$0xff]
        %v647 = vld [vmem:[%s2 + $0x50] sm:$0xff]
        %v648 = vld [vmem:[%s2 + $0x58] sm:$0xff]
        %v649 = vld [vmem:[%s2 + $0x60] sm:$0xff]
        %v650 = vld [vmem:[%s2 + $0x68] sm:$0xff]
        %v651 = vld [vmem:[%s2 + $0x70] sm:$0xff]
        %v652 = vld [vmem:[%s2 + $0x78] sm:$0xff]
        %v653 = vld [vmem:[%s2 + $0x80] sm:$0xff]
        %v654 = vld [vmem:[%s2 + $0x88] sm:$0xff]
        %v655 = vld [vmem:[%s2 + $0x90] sm:$0xff]
        %v656 = vld [vmem:[%s2 + $0x98] sm:$0xff]
        %v657 = vld [vmem:[%s2 + $0xa0] sm:$0xff]
        %v658 = vld [vmem:[%s2 + $0xa8] sm:$0xff]
        %v659 = vld [vmem:[%s2 + $0xb0] sm:$0xff]
        %v660 = vld [vmem:[%s2 + $0xb8] sm:$0xff]
        %v661 = vld [vmem:[%s2 + $0xc0] sm:$0xff]
        %v662 = vld [vmem:[%s2 + $0xc8] sm:$0xff]
        %v663 = vld [vmem:[%s2 + $0xd0] sm:$0xff]
        %v664 = vld [vmem:[%s2 + $0xd8] sm:$0xff]
        %v665 = vld [vmem:[%s2 + $0xe0] sm:$0xff]
        %v666 = vld [vmem:[%s2 + $0xe8] sm:$0xff]
        %v667 = vld [vmem:[%s2 + $0xf0] sm:$0xff]
        %v668 = vld [vmem:[%s2 + $0xf8] sm:$0xff]
        %669 = vmatpush.msra.mxu0 %v652
        %670 = vmatpush.msra.mxu0 %v651
        %671 = vmatpush.msra.mxu0 %v650
        %672 = vmatpush.msra.mxu0 %v649
        %673 = vmatpush.msra.mxu0 %v648
        %674 = vmatpush.msra.mxu0 %v647
        %675 = vmatpush.msra.mxu0 %v646
        %676 = vmatpush.msra.mxu0 %v645
        %677 = vmatpush.msra.mxu0 %v644
        %678 = vmatpush.msra.mxu0 %v643
        %679 = vmatpush.msra.mxu0 %v642
        %680 = vmatpush.msra.mxu0 %v641
        %681 = vmatpush.msra.mxu0 %v640
        %682 = vmatpush.msra.mxu0 %v639
        %683 = vmatpush.msra.mxu0 %v638
        %684 = vmatpush.msra.mxu0 %v637
        %685 = vmatmul.f32.gmra.mxu0 %v548
        %v686 = vpop.f32.mrf.mxu0
        %v687 = vadd.f32 0.0, %v686
        %688 = vmatmul.f32.gmra.mxu0 %v550
        %v689 = vpop.f32.mrf.mxu0
        %v690 = vadd.f32 0.0, %v689
        %691 = vdwg.mxu0
        %692 = vmatpush.msra.mxu0 %v668
        %693 = vmatpush.msra.mxu0 %v667
        %694 = vmatpush.msra.mxu0 %v666
        %695 = vmatpush.msra.mxu0 %v665
        %696 = vmatpush.msra.mxu0 %v664
        %697 = vmatpush.msra.mxu0 %v663
        %698 = vmatpush.msra.mxu0 %v662
        %699 = vmatpush.msra.mxu0 %v661
        %700 = vmatpush.msra.mxu0 %v660
        %701 = vmatpush.msra.mxu0 %v659
        %702 = vmatpush.msra.mxu0 %v658
        %703 = vmatpush.msra.mxu0 %v657
        %704 = vmatpush.msra.mxu0 %v656
        %705 = vmatpush.msra.mxu0 %v655
        %706 = vmatpush.msra.mxu0 %v654
        %707 = vmatpush.msra.mxu0 %v653
        %708 = vmatmul.f32.gmra.mxu0 %v549
        %v709 = vpop.f32.mrf.mxu0
        %v710 = vadd.f32 %v687, %v709
        %711 = vmatmul.f32.gmra.mxu0 %v551
        %v712 = vpop.f32.mrf.mxu0
        %v713 = vadd.f32 %v690, %v712
        %714 = vdwg.mxu0
        %717 = vrot.lane.b32.xlu0 %v710, 112
        %v718 = vpop.permute.xlu0 %717
        %719 = vrot.lane.b32.xlu0 %v713, 112
        %v720 = vpop.permute.xlu0 %719
        %v723 = vmax.f32 %v710, %v718
        %v724 = vmax.f32 %v713, %v720
        %v725 = vld [vmem:[%s3] sm:$0xff]
        %v726 = vld [vmem:[%s3 + $0x8] sm:$0xff]
        %v727 = vld [vmem:[%s3 + $0x10] sm:$0xff]
        %v728 = vld [vmem:[%s3 + $0x18] sm:$0xff]
        %v729 = vld [vmem:[%s3 + $0x20] sm:$0xff]
        %v730 = vld [vmem:[%s3 + $0x28] sm:$0xff]
        %v731 = vld [vmem:[%s3 + $0x30] sm:$0xff]
        %v732 = vld [vmem:[%s3 + $0x38] sm:$0xff]
        %v733 = vld [vmem:[%s3 + $0x40] sm:$0xff]
        %v734 = vld [vmem:[%s3 + $0x48] sm:$0xff]
        %v735 = vld [vmem:[%s3 + $0x50] sm:$0xff]
        %v736 = vld [vmem:[%s3 + $0x58] sm:$0xff]
        %v737 = vld [vmem:[%s3 + $0x60] sm:$0xff]
        %v738 = vld [vmem:[%s3 + $0x68] sm:$0xff]
        %v739 = vld [vmem:[%s3 + $0x70] sm:$0xff]
        %v740 = vld [vmem:[%s3 + $0x78] sm:$0xff]
        %v741 = vld [vmem:[%s3 + $0x80] sm:$0xff]
        %v742 = vld [vmem:[%s3 + $0x88] sm:$0xff]
        %v743 = vld [vmem:[%s3 + $0x90] sm:$0xff]
        %v744 = vld [vmem:[%s3 + $0x98] sm:$0xff]
        %v745 = vld [vmem:[%s3 + $0xa0] sm:$0xff]
        %v746 = vld [vmem:[%s3 + $0xa8] sm:$0xff]
        %v747 = vld [vmem:[%s3 + $0xb0] sm:$0xff]
        %v748 = vld [vmem:[%s3 + $0xb8] sm:$0xff]
        %v749 = vld [vmem:[%s3 + $0xc0] sm:$0xff]
        %v750 = vld [vmem:[%s3 + $0xc8] sm:$0xff]
        %v751 = vld [vmem:[%s3 + $0xd0] sm:$0xff]
        %v752 = vld [vmem:[%s3 + $0xd8] sm:$0xff]
        %v753 = vld [vmem:[%s3 + $0xe0] sm:$0xff]
        %v754 = vld [vmem:[%s3 + $0xe8] sm:$0xff]
        %v755 = vld [vmem:[%s3 + $0xf0] sm:$0xff]
        %v756 = vld [vmem:[%s3 + $0xf8] sm:$0xff]
        %757 = vmatpush.msra.mxu0 %v740
        %758 = vmatpush.msra.mxu0 %v739
        %759 = vmatpush.msra.mxu0 %v738
        %760 = vmatpush.msra.mxu0 %v737
        %761 = vmatpush.msra.mxu0 %v736
        %762 = vmatpush.msra.mxu0 %v735
        %763 = vmatpush.msra.mxu0 %v734
        %764 = vmatpush.msra.mxu0 %v733
        %765 = vmatpush.msra.mxu0 %v732
        %766 = vmatpush.msra.mxu0 %v731
        %767 = vmatpush.msra.mxu0 %v730
        %768 = vmatpush.msra.mxu0 %v729
        %769 = vmatpush.msra.mxu0 %v728
        %770 = vmatpush.msra.mxu0 %v727
        %771 = vmatpush.msra.mxu0 %v726
        %772 = vmatpush.msra.mxu0 %v725
        %773 = vmatmul.f32.gmra.mxu0 %v603
        %v774 = vpop.f32.mrf.mxu0
        %v775 = vadd.f32 0.0, %v774
        %776 = vmatmul.f32.gmra.mxu0 %v604
        %v777 = vpop.f32.mrf.mxu0
        %v778 = vadd.f32 0.0, %v777
        %779 = vdwg.mxu0
        %780 = vmatpush.msra.mxu0 %v756
        %781 = vmatpush.msra.mxu0 %v755
        %782 = vmatpush.msra.mxu0 %v754
        %783 = vmatpush.msra.mxu0 %v753
        %784 = vmatpush.msra.mxu0 %v752
        %785 = vmatpush.msra.mxu0 %v751
        %786 = vmatpush.msra.mxu0 %v750
        %787 = vmatpush.msra.mxu0 %v749
        %788 = vmatpush.msra.mxu0 %v748
        %789 = vmatpush.msra.mxu0 %v747
        %790 = vmatpush.msra.mxu0 %v746
        %791 = vmatpush.msra.mxu0 %v745
        %792 = vmatpush.msra.mxu0 %v744
        %793 = vmatpush.msra.mxu0 %v743
        %794 = vmatpush.msra.mxu0 %v742
        %795 = vmatpush.msra.mxu0 %v741
        %796 = vmatmul.f32.gmra.mxu0 %v603
        %v797 = vpop.f32.mrf.mxu0
        %v798 = vadd.f32 %v775, %v797
        %799 = vmatmul.f32.gmra.mxu0 %v604
        %v800 = vpop.f32.mrf.mxu0
        %v801 = vadd.f32 %v778, %v800
        %802 = vdwg.mxu0
        %805 = vrot.lane.b32.xlu0 %v798, 16
        %v806 = vpop.permute.xlu0 %805
        %807 = vrot.lane.b32.xlu0 %v801, 16
        %v808 = vpop.permute.xlu0 %807
        %vm811 = vcmask 130048
        %v812 = vsel %vm811, %v723, %v806
        %v813 = vsel %vm811, %v724, %v808
        %814 = vmatpush.msra.mxu0 %v620
        %815 = vmatpush.msra.mxu0 %v619
        %816 = vmatpush.msra.mxu0 %v618
        %817 = vmatpush.msra.mxu0 %v617
        %818 = vmatpush.msra.mxu0 %v616
        %819 = vmatpush.msra.mxu0 %v615
        %820 = vmatpush.msra.mxu0 %v614
        %821 = vmatpush.msra.mxu0 %v613
        %822 = vmatpush.msra.mxu0 %v612
        %823 = vmatpush.msra.mxu0 %v611
        %824 = vmatpush.msra.mxu0 %v610
        %825 = vmatpush.msra.mxu0 %v609
        %826 = vmatpush.msra.mxu0 %v608
        %827 = vmatpush.msra.mxu0 %v607
        %828 = vmatpush.msra.mxu0 %v606
        %829 = vmatpush.msra.mxu0 %v605
        %830 = vmatmul.f32.gmra.mxu0 %v418
        %v831 = vpop.f32.mrf.mxu0
        %v832 = vadd.f32 %v812, %v831
        %833 = vmatmul.f32.gmra.mxu0 %v420
        %v834 = vpop.f32.mrf.mxu0
        %v835 = vadd.f32 %v813, %v834
        %836 = vdwg.mxu0
        %837 = vmatpush.msra.mxu0 %v636
        %838 = vmatpush.msra.mxu0 %v635
        %839 = vmatpush.msra.mxu0 %v634
        %840 = vmatpush.msra.mxu0 %v633
        %841 = vmatpush.msra.mxu0 %v632
        %842 = vmatpush.msra.mxu0 %v631
        %843 = vmatpush.msra.mxu0 %v630
        %844 = vmatpush.msra.mxu0 %v629
        %845 = vmatpush.msra.mxu0 %v628
        %846 = vmatpush.msra.mxu0 %v627
        %847 = vmatpush.msra.mxu0 %v626
        %848 = vmatpush.msra.mxu0 %v625
        %849 = vmatpush.msra.mxu0 %v624
        %850 = vmatpush.msra.mxu0 %v623
        %851 = vmatpush.msra.mxu0 %v622
        %852 = vmatpush.msra.mxu0 %v621
        %853 = vmatmul.f32.gmra.mxu0 %v419
        %v854 = vpop.f32.mrf.mxu0
        %v855 = vadd.f32 %v832, %v854
        %856 = vmatmul.f32.gmra.mxu0 %v421
        %v857 = vpop.f32.mrf.mxu0
        %v858 = vadd.f32 %v835, %v857
        %859 = vdwg.mxu0
        %v860 = vld [vmem:[%s8] sm:$0xf]
        %v861 = vld [vmem:[%s9] sm:$0xf]
        %863 = vset.pattern.permute.xlu0 0
        %864 = vperm.xlu0 %863, %v861
        %v865 = vpop.permute.xlu0 %864
        %v868 = vsel %vm811, %v860, 0
        %870 = vmatpush.msra.mxu0 0.0
        %871 = vmatpush.msra.mxu0 0.0
        %872 = vmatpush.msra.mxu0 0.0
        %873 = vmatpush.msra.mxu0 0.0
        %874 = vmatpush.msra.mxu0 0.0
        %875 = vmatpush.msra.mxu0 0.0
        %876 = vmatpush.msra.mxu0 0.0
        %877 = vmatpush.msra.mxu0 0.0
        %878 = vmatpush.msra.mxu0 0.0
        %879 = vmatpush.msra.mxu0 0.0
        %880 = vmatpush.msra.mxu0 0.0
        %881 = vmatpush.msra.mxu0 0.0
        %882 = vmatpush.msra.mxu0 0.0
        %883 = vmatpush.msra.mxu0 0.0
        %884 = vmatpush.msra.mxu0 %v858
        %885 = vmatpush.msra.mxu0 %v855
        %886 = vmatmul.f32.gmra.mxu0 %v868
        %v887 = vpop.f32.mrf.mxu0
        %v888 = vadd.f32 %v865, %v887
        %889 = vdwg.mxu0
        %v890 = vmax.f32 %v888, 0.0
        %v891 = vmin.f32 %v890, 6.0
        %v892 = vld [vmem:[%s10] sm:$0xff]
        %v893 = vld [vmem:[%s10 + $0x8] sm:$0xff]
        %v894 = vld [vmem:[%s10 + $0x10] sm:$0xff]
        %v895 = vld [vmem:[%s10 + $0x18] sm:$0xff]
        %v896 = vld [vmem:[%s10 + $0x20] sm:$0xff]
        %v897 = vld [vmem:[%s10 + $0x28] sm:$0xff]
        %v898 = vld [vmem:[%s10 + $0x30] sm:$0xff]
        %v899 = vld [vmem:[%s10 + $0x38] sm:$0xff]
        %v900 = vld [vmem:[%s10 + $0x40] sm:$0xff]
        %v901 = vld [vmem:[%s10 + $0x48] sm:$0xff]
        %vm902 = vcmask 31744
        %v904 = vsel %vm902, %v892, 0
        %v907 = vsel %vm902, %v893, 0
        %v910 = vsel %vm902, %v894, 0
        %v913 = vsel %vm902, %v895, 0
        %v916 = vsel %vm902, %v896, 0
        %v919 = vsel %vm902, %v897, 0
        %v922 = vsel %vm902, %v898, 0
        %v925 = vsel %vm902, %v899, 0
        %v928 = vsel %vm902, %v900, 0
        %v931 = vsel %vm902, %v901, 0
        %vm933 = vcmask 1043456
        %v935 = vsel %vm933, %v891, 0
        %937 = vmatpush.msra.mxu0 0.0
        %938 = vmatpush.msra.mxu0 0.0
        %939 = vmatpush.msra.mxu0 0.0
        %940 = vmatpush.msra.mxu0 0.0
        %941 = vmatpush.msra.mxu0 0.0
        %942 = vmatpush.msra.mxu0 0.0
        %943 = vmatpush.msra.mxu0 0.0
        %944 = vmatpush.msra.mxu0 0.0
        %945 = vmatpush.msra.mxu0 0.0
        %946 = vmatpush.msra.mxu0 0.0
        %947 = vmatpush.msra.mxu0 0.0
        %948 = vmatpush.msra.mxu0 0.0
        %949 = vmatpush.msra.mxu0 0.0
        %950 = vmatpush.msra.mxu0 0.0
        %951 = vmatpush.msra.mxu0 0.0
        %952 = vmatpush.msra.mxu0 %v935
        %953 = vmatmul.f32.gmra.mxu0 %v904
        %v954 = vpop.f32.mrf.mxu0
        %v955 = vadd.f32 0.0, %v954
        %956 = vmatmul.f32.gmra.mxu0 %v907
        %v957 = vpop.f32.mrf.mxu0
        %v958 = vadd.f32 0.0, %v957
        %959 = vmatmul.f32.gmra.mxu0 %v910
        %v960 = vpop.f32.mrf.mxu0
        %v961 = vadd.f32 0.0, %v960
        %962 = vmatmul.f32.gmra.mxu0 %v913
        %v963 = vpop.f32.mrf.mxu0
        %v964 = vadd.f32 0.0, %v963
        %965 = vmatmul.f32.gmra.mxu0 %v916
        %v966 = vpop.f32.mrf.mxu0
        %v967 = vadd.f32 0.0, %v966
        %968 = vmatmul.f32.gmra.mxu0 %v919
        %v969 = vpop.f32.mrf.mxu0
        %v970 = vadd.f32 0.0, %v969
        %971 = vmatmul.f32.gmra.mxu0 %v922
        %v972 = vpop.f32.mrf.mxu0
        %v973 = vadd.f32 0.0, %v972
        %974 = vmatmul.f32.gmra.mxu0 %v925
        %v975 = vpop.f32.mrf.mxu0
        %v976 = vadd.f32 0.0, %v975
        %977 = vmatmul.f32.gmra.mxu0 %v928
        %v978 = vpop.f32.mrf.mxu0
        %v979 = vadd.f32 0.0, %v978
        %980 = vmatmul.f32.gmra.mxu0 %v931
        %v981 = vpop.f32.mrf.mxu0
        %v982 = vadd.f32 0.0, %v981
        %983 = vdwg.mxu0
        %v984 = vld [vmem:[%s7] sm:$0xff]
        %v985 = vld [vmem:[%s7 + $0x8] sm:$0xff]
        %v986 = vld [vmem:[%s7 + $0x10] sm:$0xff]
        %v987 = vld [vmem:[%s7 + $0x18] sm:$0xff]
        %vm988 = vcmask 261120
        %v990 = vsel %vm988, %v955, 0
        %v993 = vsel %vm988, %v958, 0
        %995 = vmatpush.msra.mxu0 0.0
        %996 = vmatpush.msra.mxu0 0.0
        %997 = vmatpush.msra.mxu0 0.0
        %998 = vmatpush.msra.mxu0 0.0
        %999 = vmatpush.msra.mxu0 0.0
        %1000 = vmatpush.msra.mxu0 0.0
        %1001 = vmatpush.msra.mxu0 0.0
        %1002 = vmatpush.msra.mxu0 0.0
        %1003 = vmatpush.msra.mxu0 0.0
        %1004 = vmatpush.msra.mxu0 0.0
        %1005 = vmatpush.msra.mxu0 0.0
        %1006 = vmatpush.msra.mxu0 0.0
        %1007 = vmatpush.msra.mxu0 %v987
        %1008 = vmatpush.msra.mxu0 %v986
        %1009 = vmatpush.msra.mxu0 %v985
        %1010 = vmatpush.msra.mxu0 %v984
        %1011 = vmatmul.f32.gmra.mxu0 %v990
        %v1012 = vpop.f32.mrf.mxu0
        %v1013 = vadd.f32 0.0, %v1012
        %1014 = vmatmul.f32.gmra.mxu0 %v993
        %v1015 = vpop.f32.mrf.mxu0
        %v1016 = vadd.f32 0.0, %v1015
        %1017 = vdwg.mxu0
        %v1018 = vadd.f32 %v961, %v1013
        %v1019 = vadd.f32 %v964, %v1016
        %s1020 = scalar_lea.vmem %s7, 32
        %v1021 = vld [vmem:[%s1020] sm:$0xff]
        %v1022 = vld [vmem:[%s1020 + $0x8] sm:$0xff]
        %v1023 = vld [vmem:[%s1020 + $0x10] sm:$0xff]
        %v1024 = vld [vmem:[%s1020 + $0x18] sm:$0xff]
        %v1026 = vsel %vm988, %v967, 0
        %v1029 = vsel %vm988, %v970, 0
        %1031 = vmatpush.msra.mxu0 0.0
        %1032 = vmatpush.msra.mxu0 0.0
        %1033 = vmatpush.msra.mxu0 0.0
        %1034 = vmatpush.msra.mxu0 0.0
        %1035 = vmatpush.msra.mxu0 0.0
        %1036 = vmatpush.msra.mxu0 0.0
        %1037 = vmatpush.msra.mxu0 0.0
        %1038 = vmatpush.msra.mxu0 0.0
        %1039 = vmatpush.msra.mxu0 0.0
        %1040 = vmatpush.msra.mxu0 0.0
        %1041 = vmatpush.msra.mxu0 0.0
        %1042 = vmatpush.msra.mxu0 0.0
        %1043 = vmatpush.msra.mxu0 %v1024
        %1044 = vmatpush.msra.mxu0 %v1023
        %1045 = vmatpush.msra.mxu0 %v1022
        %1046 = vmatpush.msra.mxu0 %v1021
        %1047 = vmatmul.f32.gmra.mxu0 %v1026
        %v1048 = vpop.f32.mrf.mxu0
        %v1049 = vadd.f32 0.0, %v1048
        %1050 = vmatmul.f32.gmra.mxu0 %v1029
        %v1051 = vpop.f32.mrf.mxu0
        %v1052 = vadd.f32 0.0, %v1051
        %1053 = vdwg.mxu0
        %v1054 = vadd.f32 %v1018, %v1049
        %v1055 = vadd.f32 %v1019, %v1052
        %s1056 = scalar_lea.vmem %s7, 64
        %v1057 = vld [vmem:[%s1056] sm:$0xff]
        %v1058 = vld [vmem:[%s1056 + $0x8] sm:$0xff]
        %v1059 = vld [vmem:[%s1056 + $0x10] sm:$0xff]
        %v1060 = vld [vmem:[%s1056 + $0x18] sm:$0xff]
        %v1062 = vsel %vm988, %v973, 0
        %v1065 = vsel %vm988, %v976, 0
        %1067 = vmatpush.msra.mxu0 0.0
        %1068 = vmatpush.msra.mxu0 0.0
        %1069 = vmatpush.msra.mxu0 0.0
        %1070 = vmatpush.msra.mxu0 0.0
        %1071 = vmatpush.msra.mxu0 0.0
        %1072 = vmatpush.msra.mxu0 0.0
        %1073 = vmatpush.msra.mxu0 0.0
        %1074 = vmatpush.msra.mxu0 0.0
        %1075 = vmatpush.msra.mxu0 0.0
        %1076 = vmatpush.msra.mxu0 0.0
        %1077 = vmatpush.msra.mxu0 0.0
        %1078 = vmatpush.msra.mxu0 0.0
        %1079 = vmatpush.msra.mxu0 %v1060
        %1080 = vmatpush.msra.mxu0 %v1059
        %1081 = vmatpush.msra.mxu0 %v1058
        %1082 = vmatpush.msra.mxu0 %v1057
        %1083 = vmatmul.f32.gmra.mxu0 %v1062
        %v1084 = vpop.f32.mrf.mxu0
        %v1085 = vadd.f32 0.0, %v1084
        %1086 = vmatmul.f32.gmra.mxu0 %v1065
        %v1087 = vpop.f32.mrf.mxu0
        %v1088 = vadd.f32 0.0, %v1087
        %1089 = vdwg.mxu0
        %v1090 = vadd.f32 %v1054, %v1085
        %v1091 = vadd.f32 %v1055, %v1088
        %s1092 = scalar_lea.vmem %s7, 96
        %v1093 = vld [vmem:[%s1092] sm:$0xff]
        %v1094 = vld [vmem:[%s1092 + $0x8] sm:$0xff]
        %v1095 = vld [vmem:[%s1092 + $0x10] sm:$0xff]
        %v1096 = vld [vmem:[%s1092 + $0x18] sm:$0xff]
        %v1098 = vsel %vm988, %v979, 0
        %v1101 = vsel %vm988, %v982, 0
        %1103 = vmatpush.msra.mxu0 0.0
        %1104 = vmatpush.msra.mxu0 0.0
        %1105 = vmatpush.msra.mxu0 0.0
        %1106 = vmatpush.msra.mxu0 0.0
        %1107 = vmatpush.msra.mxu0 0.0
        %1108 = vmatpush.msra.mxu0 0.0
        %1109 = vmatpush.msra.mxu0 0.0
        %1110 = vmatpush.msra.mxu0 0.0
        %1111 = vmatpush.msra.mxu0 0.0
        %1112 = vmatpush.msra.mxu0 0.0
        %1113 = vmatpush.msra.mxu0 0.0
        %1114 = vmatpush.msra.mxu0 0.0
        %1115 = vmatpush.msra.mxu0 %v1096
        %1116 = vmatpush.msra.mxu0 %v1095
        %1117 = vmatpush.msra.mxu0 %v1094
        %1118 = vmatpush.msra.mxu0 %v1093
        %1119 = vmatmul.f32.gmra.mxu0 %v1098
        %v1120 = vpop.f32.mrf.mxu0
        %v1121 = vadd.f32 0.0, %v1120
        %1122 = vmatmul.f32.gmra.mxu0 %v1101
        %v1123 = vpop.f32.mrf.mxu0
        %v1124 = vadd.f32 0.0, %v1123
        %1125 = vdwg.mxu0
        %v1126 = vadd.f32 %v1090, %v1121
        %v1127 = vadd.f32 %v1091, %v1124
        %v1128 = vld [vmem:[%s11] sm:$0xff]
        %v1129 = vld [vmem:[%s11 + $0x8] sm:$0xff]
        %1131 = vset.pattern.permute.xlu0 0
        %1132 = vperm.xlu0 %1131, %v1128
        %v1133 = vpop.permute.xlu0 %1132
        %1136 = vset.pattern.permute.xlu0 0
        %1137 = vperm.xlu0 %1136, %v1129
        %v1138 = vpop.permute.xlu0 %1137
        %v1140 = vadd.f32 %v1126, %v1133
        %v1141 = vadd.f32 %v1127, %v1138
        %v1142 = vld [vmem:[%s4] sm:$0xff]
        %v1143 = vld [vmem:[%s4 + $0x8] sm:$0xff]
        %v1144 = vld [vmem:[%s4 + $0x10] sm:$0xff]
        %v1145 = vld [vmem:[%s4 + $0x18] sm:$0xff]
        %v1147 = vsel %vm811, %v1140, 0
        %v1150 = vsel %vm811, %v1141, 0
        %1152 = vmatpush.msra.mxu0 0.0
        %1153 = vmatpush.msra.mxu0 0.0
        %1154 = vmatpush.msra.mxu0 0.0
        %1155 = vmatpush.msra.mxu0 0.0
        %1156 = vmatpush.msra.mxu0 0.0
        %1157 = vmatpush.msra.mxu0 0.0
        %1158 = vmatpush.msra.mxu0 0.0
        %1159 = vmatpush.msra.mxu0 0.0
        %1160 = vmatpush.msra.mxu0 0.0
        %1161 = vmatpush.msra.mxu0 0.0
        %1162 = vmatpush.msra.mxu0 0.0
        %1163 = vmatpush.msra.mxu0 0.0
        %1164 = vmatpush.msra.mxu0 0.0
        %1165 = vmatpush.msra.mxu0 0.0
        %1166 = vmatpush.msra.mxu0 %v1144
        %1167 = vmatpush.msra.mxu0 %v1142
        %1168 = vmatmul.f32.gmra.mxu0 %v1147
        %v1169 = vpop.f32.mrf.mxu0
        %v1170 = vadd.f32 0.0, %v1169
        %1171 = vmatmul.f32.gmra.mxu0 %v1150
        %v1172 = vpop.f32.mrf.mxu0
        %v1173 = vadd.f32 0.0, %v1172
        %1174 = vdwg.mxu0
        %1175 = vmatpush.msra.mxu0 0.0
        %1176 = vmatpush.msra.mxu0 0.0
        %1177 = vmatpush.msra.mxu0 0.0
        %1178 = vmatpush.msra.mxu0 0.0
        %1179 = vmatpush.msra.mxu0 0.0
        %1180 = vmatpush.msra.mxu0 0.0
        %1181 = vmatpush.msra.mxu0 0.0
        %1182 = vmatpush.msra.mxu0 0.0
        %1183 = vmatpush.msra.mxu0 0.0
        %1184 = vmatpush.msra.mxu0 0.0
        %1185 = vmatpush.msra.mxu0 0.0
        %1186 = vmatpush.msra.mxu0 0.0
        %1187 = vmatpush.msra.mxu0 0.0
        %1188 = vmatpush.msra.mxu0 0.0
        %1189 = vmatpush.msra.mxu0 %v1145
        %1190 = vmatpush.msra.mxu0 %v1143
        %1191 = vmatmul.f32.gmra.mxu0 %v1147
        %v1192 = vpop.f32.mrf.mxu0
        %v1193 = vadd.f32 0.0, %v1192
        %1194 = vmatmul.f32.gmra.mxu0 %v1150
        %v1195 = vpop.f32.mrf.mxu0
        %v1196 = vadd.f32 0.0, %v1195
        %1197 = vdwg.mxu0
        %v1198 = vld [vmem:[%s5] sm:$0xff]
        %v1199 = vld [vmem:[%s5 + $0x8] sm:$0xff]
        %v1200 = vld [vmem:[%s5 + $0x10] sm:$0xff]
        %v1201 = vld [vmem:[%s5 + $0x18] sm:$0xff]
        %1202 = vrot.lane.b32.xlu0 %v1140, 112
        %v1203 = vpop.permute.xlu0 %1202
        %1204 = vrot.lane.b32.xlu0 %v1141, 112
        %v1205 = vpop.permute.xlu0 %1204
        %v1206 = vsel %vm811, %v1203, 0
        %v1208 = vsel %vm811, %v1205, 0
        %1210 = vmatpush.msra.mxu0 0.0
        %1211 = vmatpush.msra.mxu0 0.0
        %1212 = vmatpush.msra.mxu0 0.0
        %1213 = vmatpush.msra.mxu0 0.0
        %1214 = vmatpush.msra.mxu0 0.0
        %1215 = vmatpush.msra.mxu0 0.0
        %1216 = vmatpush.msra.mxu0 0.0
        %1217 = vmatpush.msra.mxu0 0.0
        %1218 = vmatpush.msra.mxu0 0.0
        %1219 = vmatpush.msra.mxu0 0.0
        %1220 = vmatpush.msra.mxu0 0.0
        %1221 = vmatpush.msra.mxu0 0.0
        %1222 = vmatpush.msra.mxu0 0.0
        %1223 = vmatpush.msra.mxu0 0.0
        %1224 = vmatpush.msra.mxu0 %v1200
        %1225 = vmatpush.msra.mxu0 %v1198
        %1226 = vmatmul.f32.gmra.mxu0 %v1206
        %v1227 = vpop.f32.mrf.mxu0
        %v1228 = vadd.f32 0.0, %v1227
        %1229 = vmatmul.f32.gmra.mxu0 %v1208
        %v1230 = vpop.f32.mrf.mxu0
        %v1231 = vadd.f32 0.0, %v1230
        %1232 = vdwg.mxu0
        %1233 = vmatpush.msra.mxu0 0.0
        %1234 = vmatpush.msra.mxu0 0.0
        %1235 = vmatpush.msra.mxu0 0.0
        %1236 = vmatpush.msra.mxu0 0.0
        %1237 = vmatpush.msra.mxu0 0.0
        %1238 = vmatpush.msra.mxu0 0.0
        %1239 = vmatpush.msra.mxu0 0.0
        %1240 = vmatpush.msra.mxu0 0.0
        %1241 = vmatpush.msra.mxu0 0.0
        %1242 = vmatpush.msra.mxu0 0.0
        %1243 = vmatpush.msra.mxu0 0.0
        %1244 = vmatpush.msra.mxu0 0.0
        %1245 = vmatpush.msra.mxu0 0.0
        %1246 = vmatpush.msra.mxu0 0.0
        %1247 = vmatpush.msra.mxu0 %v1201
        %1248 = vmatpush.msra.mxu0 %v1199
        %1249 = vmatmul.f32.gmra.mxu0 %v1206
        %v1250 = vpop.f32.mrf.mxu0
        %v1251 = vadd.f32 0.0, %v1250
        %1252 = vmatmul.f32.gmra.mxu0 %v1208
        %v1253 = vpop.f32.mrf.mxu0
        %v1254 = vadd.f32 0.0, %v1253
        %1255 = vdwg.mxu0
        %v1256 = vmul.f32 %v1170, %v1228
        %v1257 = vmul.f32 %v1193, %v1251
        %v1258 = vmul.f32 %v1173, %v1231
        %v1259 = vmul.f32 %v1196, %v1254
        %v1260 = vxor.u32 %v1256, 2147483648
        %v1261 = vxor.u32 %v1257, 2147483648
        %v1262 = vxor.u32 %v1258, 2147483648
        %v1263 = vxor.u32 %v1259, 2147483648
        %v1264 = vmul.f32 %v1260, 1.442695
        %v1265 = vpow.pop %v1264
        %v1266 = vmul.f32 %v1261, 1.442695
        %v1267 = vpow.pop %v1266
        %v1268 = vmul.f32 %v1262, 1.442695
        %v1269 = vpow.pop %v1268
        %v1270 = vmul.f32 %v1263, 1.442695
        %v1271 = vpow.pop %v1270
        %v1272 = vadd.f32 %v1265, 1.0
        %v1273 = vadd.f32 %v1267, 1.0
        %v1274 = vadd.f32 %v1269, 1.0
        %v1275 = vadd.f32 %v1271, 1.0
        %v1276 = vrcp.pop %v1272
        %v1277 = vmul.f32 %v1272, %v1276
        %v1278 = vsub.f32 1.0, %v1277
        %v1279 = vmul.f32 %v1276, %v1278
        %v1280 = vadd.f32 %v1276, %v1279
        %vm1281 = vweird.f32 %v1272
        %vm1282 = vweird.f32 %v1276
        %vm1283 = vmor %vm1281, %vm1282
        %v1284 = vsel %vm1283, %v1276, %v1280
        %v1285 = vand.u32 2147483647, %v1272
        %vm1286 = vcmp.eq.f32.partialorder %v1285, 8.507059e+37
        %v1287 = vand.u32 %v1272, 2147483648
        %v1288 = vor.u32 1.1754944e-38, %v1287
        %v1289 = vsel %vm1286, %v1288, %v1284
        %v1290 = vmul.f32 1.0, %v1289
        %v1291 = vrcp.pop %v1273
        %v1292 = vmul.f32 %v1273, %v1291
        %v1293 = vsub.f32 1.0, %v1292
        %v1294 = vmul.f32 %v1291, %v1293
        %v1295 = vadd.f32 %v1291, %v1294
        %vm1296 = vweird.f32 %v1273
        %vm1297 = vweird.f32 %v1291
        %vm1298 = vmor %vm1296, %vm1297
        %v1299 = vsel %vm1298, %v1291, %v1295
        %v1300 = vand.u32 2147483647, %v1273
        %vm1301 = vcmp.eq.f32.partialorder %v1300, 8.507059e+37
        %v1302 = vand.u32 %v1273, 2147483648
        %v1303 = vor.u32 1.1754944e-38, %v1302
        %v1304 = vsel %vm1301, %v1303, %v1299
        %v1305 = vmul.f32 1.0, %v1304
        %v1306 = vrcp.pop %v1274
        %v1307 = vmul.f32 %v1274, %v1306
        %v1308 = vsub.f32 1.0, %v1307
        %v1309 = vmul.f32 %v1306, %v1308
        %v1310 = vadd.f32 %v1306, %v1309
        %vm1311 = vweird.f32 %v1274
        %vm1312 = vweird.f32 %v1306
        %vm1313 = vmor %vm1311, %vm1312
        %v1314 = vsel %vm1313, %v1306, %v1310
        %v1315 = vand.u32 2147483647, %v1274
        %vm1316 = vcmp.eq.f32.partialorder %v1315, 8.507059e+37
        %v1317 = vand.u32 %v1274, 2147483648
        %v1318 = vor.u32 1.1754944e-38, %v1317
        %v1319 = vsel %vm1316, %v1318, %v1314
        %v1320 = vmul.f32 1.0, %v1319
        %v1321 = vrcp.pop %v1275
        %v1322 = vmul.f32 %v1275, %v1321
        %v1323 = vsub.f32 1.0, %v1322
        %v1324 = vmul.f32 %v1321, %v1323
        %v1325 = vadd.f32 %v1321, %v1324
        %vm1326 = vweird.f32 %v1275
        %vm1327 = vweird.f32 %v1321
        %vm1328 = vmor %vm1326, %vm1327
        %v1329 = vsel %vm1328, %v1321, %v1325
        %v1330 = vand.u32 2147483647, %v1275
        %vm1331 = vcmp.eq.f32.partialorder %v1330, 8.507059e+37
        %v1332 = vand.u32 %v1275, 2147483648
        %v1333 = vor.u32 1.1754944e-38, %v1332
        %v1334 = vsel %vm1331, %v1333, %v1329
        %v1335 = vmul.f32 1.0, %v1334
        %v1336 = vadd.f32 %v1290, 1.0
        %v1337 = vadd.f32 %v1305, 1.0
        %v1338 = vadd.f32 %v1320, 1.0
        %v1339 = vadd.f32 %v1335, 1.0
        %v1340 = vmul.f32 %v418, %v1336
        %v1341 = vmul.f32 %v419, %v1337
        %v1342 = vmul.f32 %v420, %v1338
        %v1343 = vmul.f32 %v421, %v1339
        %1344 = vst [vmem:[%s409] sm:$0xff] %v1340
        %1345 = vst [vmem:[%s409 + $0x8] sm:$0xff] %v1341
        %1346 = vst [vmem:[%s409 + $0x10] sm:$0xff] %v1342
        %1347 = vst [vmem:[%s409 + $0x18] sm:$0xff] %v1343
        %s1348 = sand.u32 %s291, 1
        %s1349 = scalar_lea.sflag [#allocation3], %s1348
        %s1350 = sand.u32 %s291, 1
        %s1351 = smul.addr %s1350, 32
        %s1352 = scalar_lea.vmem [#allocation2], %s1351
        // Predicated region
        $region69: #{tpu_custom_call.1} parent=67 // pred_check
          %p1353 = pneg %p301
        $region70: #{tpu_custom_call.1} parent=67 // pred_check_branch
          %1355 = sbr.rel (%p1353) target = $region72
        $region71: #{tpu_custom_call.1} parent=67 // pred_region
          %s1356 = smul.u32 2, %s26
          %1358 = vsyncadd %s1349, 0
          %s1359 = smul.addr %s1356, 2
          %s1360 = smul.addr %s1359, 8
          %s1361 = scalar_lea.hbm %s12, %s1360
          %s1362 = sshll.u32 %s1352, 4
          %s1363 = int_to_ptr.vmem [resolvable:$true] %s1362
          %s1364 = sshll.u32 %s1361, 4
          %s1365 = int_to_ptr.hbm [resolvable:$true] %s1364
          %1370 = dma.vmem_to_hbm [thread:$0]  %s1363, 512, %s1365, %s1349, 256, 256, 16
        $region72: #{tpu_custom_call.1} parent=67 // pred_fallthru
          _
      $region68: #{tpu_custom_call.1} parent=5 // pred_fallthru
        _
      %p1371 = scmp.le.s32.totalorder 2, %s21
      // Predicated region
      $region73: #{tpu_custom_call.1} parent=5 // pred_check
        %p1372 = pneg %p1371
      $region74: #{tpu_custom_call.1} parent=5 // pred_check_branch
        %1374 = sbr.rel (%p1372) target = $region76
      $region75: #{tpu_custom_call.1} parent=5 // pred_region
        %s1375 = ssub.s32 %s21, 2
        // Predicated region
        $region77: #{tpu_custom_call.1} parent=75 // pred_check
          %p1376 = pneg %p307
        $region78: #{tpu_custom_call.1} parent=75 // pred_check_branch
          %1378 = sbr.rel (%p1376) target = $region80
        $region79: #{tpu_custom_call.1} parent=75 // pred_region
          %s1379 = sand.u32 %s292, 1
          %s1380 = scalar_lea.sflag [#allocation3], %s1379
          %s1381 = sand.u32 %s292, 1
          %s1382 = smul.addr %s1381, 32
          %s1383 = scalar_lea.vmem [#allocation2], %s1382
          %1385 = dma.done %s1380, 512
        $region80: #{tpu_custom_call.1} parent=75 // pred_fallthru
          _
      $region76: #{tpu_custom_call.1} parent=5 // pred_fallthru
        _
    $region6: #{tpu_custom_call.1} parent=1 // loop_footer
      %s25 = sadd.s32 1, %s21
    $region7: #{tpu_custom_call.1} parent=1 // loop_footer_branch
      %20 = sbr.rel target = $region3
    $region8: #{tpu_custom_call.1} parent=1 // loop_exit
      _
    %1386 = vsyncpa [#allocation3], 1
    %s1387 = scalar_lea.sflag [#allocation3], 1
    %1388 = vsyncpa %s1387, 1

</llo_original>
